<compile_context>
chip_gen: v7x
topology: tpu7x:2x2x1
jax: 0.10.0
libtpu: 0.0.40
codegen_flags: <defaults>
</compile_context>

<pallas_src>
import numpy as np
import jax
import jax.numpy as jnp
from jax.experimental import pallas as pl
from jax.experimental.pallas import tpu as pltpu

NEG_SLOPE = 0.01  # F.leaky_relu default negative_slope
MAX_TB = 512      # batch tile: safe for v5e 16MiB scoped VMEM / v7x 64MiB physical


def _leaky_relu(x):
    return jnp.where(x > 0, x, NEG_SLOPE * x)


def _dleaky(z):
    return jnp.where(z > 0, 1.0, NEG_SLOPE)


def _round_up(x, m):
    return ((x + m - 1) // m) * m


def _choose_tile(b):
    """(padded_batch, batch_tile); tile is a multiple of 8, capped at MAX_TB."""
    bp = _round_up(max(int(b), 1), 8)
    if bp <= MAX_TB:
        return bp, bp
    return _round_up(bp, MAX_TB), MAX_TB


# --------------------------------------------------------------------------------------
# Parameter init (mirrors nn.Linear default init ranges), weights stored as (in, out)
# --------------------------------------------------------------------------------------
def init_proxy_params(key, problem_dim, use_pe, n_enc, out_dim, n_layers, n_hidden):
    infeat = problem_dim if not use_pe else 2 * n_enc * problem_dim + problem_dim
    dims = [infeat] + [n_hidden] * n_layers + [out_dim]
    weights, biases = [], []
    for i in range(len(dims) - 1):
        key, kw, kb = jax.random.split(key, 3)
        bound = 1.0 / (dims[i] ** 0.5)
        W = jax.random.uniform(kw, (dims[i], dims[i + 1]), jnp.float32, -bound, bound)
        b = jax.random.uniform(kb, (1, dims[i + 1]), jnp.float32, -bound, bound)
        weights.append(W)
        biases.append(b)
    return weights, biases


# --------------------------------------------------------------------------------------
# Host-side packing: ONE contiguous (8,128)-padded f32 buffer + static row-offset layout.
# Every block is zero-padded to the full packed lane width PW (>=128); blocks that are
# contracted against a 128-lane activation are additionally zero-padded to PW rows so the
# kernels always read full, vreg-aligned (rows, PW) views (no 0:NH lane slicing).
# --------------------------------------------------------------------------------------
def pack_params(weights, biases, use_pe, n_enc, problem_dim):
    D = problem_dim
    NH = weights[0].shape[1]
    assert weights[-1].shape[1] == 1, "ones-seed backward assumes a scalar proxy output"
    NED = n_enc * D
    PW = _round_up(max(NH, D, NED if use_pe else 0, 1), 128)
    assert NH <= PW and D <= PW and (not use_pe or NED <= PW)

    W = [np.asarray(w, np.float32) for w in weights]
    Bs = [np.asarray(b, np.float32).reshape(1, -1) for b in biases]

    blocks, offsets = [], {}
    cur = 0

    def add(name, arr, rows_pad=None):
        nonlocal cur
        arr = np.asarray(arr, np.float32)
        r, c = arr.shape
        rp = _round_up(r, 8) if rows_pad is None else rows_pad
        assert rp >= r and c <= PW
        blk = np.zeros((rp, PW), np.float32)      # padded rows/lanes are exactly zero
        blk[:r, :c] = arr
        offsets[name] = cur
        cur += rp
        blocks.append(blk)

    if use_pe:
        freqs = 2.0 ** np.arange(n_enc, dtype=np.float32)   # log_sampling -> powers of 2
        # angles = x @ FMAT tiles x across frequencies and applies the 2^k scales.
        FMAT = np.zeros((D, NED), np.float32)
        for k in range(n_enc):
            for d in range(D):
                FMAT[d, k * D + d] = freqs[k]
        add('fmat', FMAT)                        # (D, NED) forward; contract vs x (D lanes)
        add('fmatt', FMAT.T, rows_pad=PW)        # (NED, D) backward; contract vs 128-lane u
        # Split W0 into x / sin / cos row-blocks (PyTorch PE layout is interleaved
        # [x, sin f0, cos f0, sin f1, ...]); layer 0 becomes three direct matmuls.
        W0 = W[0]
        xb = W0[0:D]
        sinb = np.concatenate([W0[D + 2 * k * D: D + (2 * k + 1) * D]
                               for k in range(n_enc)], axis=0)
        cosb = np.concatenate([W0[D + (2 * k + 1) * D: D + (2 * k + 2) * D]
                               for k in range(n_enc)], axis=0)
        add('w0x', xb)                           # (D, NH)
        add('w0sin', sinb, rows_pad=PW)          # (NED, NH) -> PW rows (vs 128-lane sin)
        add('w0cos', cosb, rows_pad=PW)          # (NED, NH) -> PW rows (vs 128-lane cos)
        add('w0xt', xb.T, rows_pad=PW)           # (NH, D)   backward
        add('w0sint', sinb.T, rows_pad=PW)       # (NH, NED) backward
        add('w0cost', cosb.T, rows_pad=PW)       # (NH, NED) backward
    else:
        add('w0', W[0])                          # (D, NH)
        add('w0t', W[0].T, rows_pad=PW)          # (NH, D)
    add('b0', Bs[0])

    mid = []
    for j in range(1, len(W) - 1):
        add(f'w{j}', W[j], rows_pad=PW)          # (NH, NH) -> (PW, PW) full tile
        add(f'w{j}t', W[j].T, rows_pad=PW)       # pre-transposed: no in-kernel transpose
        add(f'b{j}', Bs[j])
        mid.append((offsets[f'w{j}'], offsets[f'w{j}t'], offsets[f'b{j}']))

    add('wl', W[-1].T)                           # (1, NH): last layer on VPU/XLU
    add('bl', Bs[-1])                            # (1, 1)

    packed = jnp.asarray(np.concatenate(blocks, axis=0))
    layout = dict(use_pe=bool(use_pe), D=D, NH=NH, NED=NED, PW=PW,
                  rows=int(packed.shape[0]), offsets=offsets, mid=tuple(mid))
    return packed, layout


# --------------------------------------------------------------------------------------
# Pallas kernels (one batch tile per grid step; params ref is whole-buffer, VMEM-resident)
# --------------------------------------------------------------------------------------
def make_forward_kernel(layout):
    use_pe = layout['use_pe']
    D, PW = layout['D'], layout['PW']
    off, mid = layout['offsets'], layout['mid']

    def kernel(x_ref, prm_ref, out_ref):
        x = x_ref[...]                                               # (TB, D)
        b0 = prm_ref[off['b0']:off['b0'] + 1, :]                     # (1, PW)
        if use_pe:
            fmat = prm_ref[off['fmat']:off['fmat'] + D, :]           # (D, PW)
            ang = jnp.dot(x, fmat, preferred_element_type=jnp.float32)   # (TB, PW)
            s = jnp.sin(ang)                                         # 1 bulk EUP sin
            c = jnp.cos(ang)                                         # 1 bulk EUP cos
            w0x = prm_ref[off['w0x']:off['w0x'] + D, :]
            w0s = prm_ref[off['w0sin']:off['w0sin'] + PW, :]
            w0c = prm_ref[off['w0cos']:off['w0cos'] + PW, :]
            z0 = (jnp.dot(x, w0x, preferred_element_type=jnp.float32)
                  + jnp.dot(s, w0s, preferred_element_type=jnp.float32)
                  + jnp.dot(c, w0c, preferred_element_type=jnp.float32) + b0)
        else:
            w0 = prm_ref[off['w0']:off['w0'] + D, :]
            z0 = jnp.dot(x, w0, preferred_element_type=jnp.float32) + b0
        h = _leaky_relu(z0)                                          # (TB, PW), pad lanes 0
        for (wr, _wtr, br) in mid:
            w = prm_ref[wr:wr + PW, :]                               # full (PW, PW) tile
            b = prm_ref[br:br + 1, :]
            h = _leaky_relu(jnp.dot(h, w, preferred_element_type=jnp.float32) + b)
        # degenerate (NH, 1) last layer on VPU/XLU: multiply + lane reduce, no MXU pass
        wl = prm_ref[off['wl']:off['wl'] + 1, :]                     # (1, PW)
        bl = prm_ref[off['bl']:off['bl'] + 1, :][:, 0:1]             # (1, 1)
        z = jnp.sum(h * wl, axis=-1, keepdims=True) + bl             # (TB, 1)
        out_ref[...] = _leaky_relu(z).astype(out_ref.dtype)

    return kernel


def make_grad_kernel(layout):
    """d(scalar proxy output)/d(x) (replaces torch.autograd.grad): forward with saved
    pre-activations, then a hand-derived backward using pre-transposed weight blocks."""
    use_pe = layout['use_pe']
    D, PW = layout['D'], layout['PW']
    off, mid = layout['offsets'], layout['mid']

    def kernel(x_ref, prm_ref, g_ref):
        x = x_ref[...]                                               # (TB, D)
        b0 = prm_ref[off['b0']:off['b0'] + 1, :]
        # ---- forward (keep pre-activations) ----
        if use_pe:
            fmat = prm_ref[off['fmat']:off['fmat'] + D, :]
            ang = jnp.dot(x, fmat, preferred_element_type=jnp.float32)
            s = jnp.sin(ang)
            c = jnp.cos(ang)
            w0x = prm_ref[off['w0x']:off['w0x'] + D, :]
            w0s = prm_ref[off['w0sin']:off['w0sin'] + PW, :]
            w0c = prm_ref[off['w0cos']:off['w0cos'] + PW, :]
            z0 = (jnp.dot(x, w0x, preferred_element_type=jnp.float32)
                  + jnp.dot(s, w0s, preferred_element_type=jnp.float32)
                  + jnp.dot(c, w0c, preferred_element_type=jnp.float32) + b0)
        else:
            w0 = prm_ref[off['w0']:off['w0'] + D, :]
            z0 = jnp.dot(x, w0, preferred_element_type=jnp.float32) + b0
        h = _leaky_relu(z0)
        zs = []
        for (wr, _wtr, br) in mid:
            w = prm_ref[wr:wr + PW, :]
            b = prm_ref[br:br + 1, :]
            z = jnp.dot(h, w, preferred_element_type=jnp.float32) + b
            zs.append(z)
            h = _leaky_relu(z)
        wl = prm_ref[off['wl']:off['wl'] + 1, :]                     # (1, PW)
        bl = prm_ref[off['bl']:off['bl'] + 1, :][:, 0:1]
        zl = jnp.sum(h * wl, axis=-1, keepdims=True) + bl            # (TB, 1)

        # ---- backward (seed = ones: grad of the scalar output, out_dim == 1) ----
        dzl = _dleaky(zl)                                            # (TB, 1)
        g = dzl * wl                                                 # VPU broadcast (TB, PW)
        for (_wr, wtr, _br), z in zip(reversed(mid), reversed(zs)):
            dz = g * _dleaky(z)
            wt = prm_ref[wtr:wtr + PW, :]                            # pre-transposed W^T
            g = jnp.dot(dz, wt, preferred_element_type=jnp.float32)
        dz0 = g * _dleaky(z0)
        if use_pe:
            w0xt = prm_ref[off['w0xt']:off['w0xt'] + PW, :]
            w0st = prm_ref[off['w0sint']:off['w0sint'] + PW, :]
            w0ct = prm_ref[off['w0cost']:off['w0cost'] + PW, :]
            gx = jnp.dot(dz0, w0xt, preferred_element_type=jnp.float32)   # direct x path
            dsin = jnp.dot(dz0, w0st, preferred_element_type=jnp.float32)
            dcos = jnp.dot(dz0, w0ct, preferred_element_type=jnp.float32)
            u = dsin * c - dcos * s                                  # d/d(angles)
            fmatt = prm_ref[off['fmatt']:off['fmatt'] + PW, :]
            gx = gx + jnp.dot(u, fmatt, preferred_element_type=jnp.float32)
        else:
            w0t = prm_ref[off['w0t']:off['w0t'] + PW, :]
            gx = jnp.dot(dz0, w0t, preferred_element_type=jnp.float32)
        g_ref[...] = gx[:, 0:D].astype(g_ref.dtype)

    return kernel


# --------------------------------------------------------------------------------------
# pallas_call builders: 1-D parallel batch grid, VMEM-resident packed params
# --------------------------------------------------------------------------------------
def _build_call(kernel, layout, batch, out_cols):
    bp, tb = _choose_tile(batch)
    rows, PW, D = layout['rows'], layout['PW'], layout['D']
    call = pl.pallas_call(
        kernel,
        out_shape=jax.ShapeDtypeStruct((bp, out_cols), jnp.float32),
        grid=(bp // tb,),
        in_specs=[
            pl.BlockSpec((tb, D), lambda i: (i, 0)),        # batch-tiled input
            pl.BlockSpec((rows, PW), lambda i: (0, 0)),     # params: DMA once, resident
        ],
        out_specs=pl.BlockSpec((tb, out_cols), lambda i: (i, 0)),
        compiler_params=pltpu.CompilerParams(dimension_semantics=("parallel",)),
    )

    def fn(x2, packed):
        b = x2.shape[0]
        xp = x2 if b == bp else jnp.pad(x2, ((0, bp - b), (0, 0)))
        out = call(xp, packed)
        return out[:b]

    return jax.jit(fn)


def build_forward_fn(layout, batch):
    return _build_call(make_forward_kernel(layout), layout, batch, out_cols=1)


def build_grad_fn(layout, batch):
    return _build_call(make_grad_kernel(layout), layout, batch, out_cols=layout['D'])


# --------------------------------------------------------------------------------------
# NeuralProxy (Pallas version)
# --------------------------------------------------------------------------------------
class NeuralProxyPallas:
    def __init__(self, argdict, normalize_fn, key):
        self.ctx = {}
        self.normalize_fn = normalize_fn
        self.is_logspace = argdict['is_logspace']
        self.criterion = argdict['criterion_proxy']
        self.problem_dim = argdict['ndim']
        self.use_pe = argdict['use_posEnc']
        self.n_enc = argdict['num_encodings']
        self.weights, self.biases = init_proxy_params(
            key, argdict['ndim'], argdict['use_posEnc'], argdict['num_encodings'],
            out_dim=1, n_layers=argdict['num_layers'], n_hidden=argdict['num_neurons'])
        self.packed, self.layout = pack_params(
            self.weights, self.biases, self.use_pe, self.n_enc, self.problem_dim)
        self._fwd_cache = {}   # batch -> jitted pallas_call wrapper
        self._grad_cache = {}

    def _fwd_fn(self, batch):
        fn = self._fwd_cache.get(batch)
        if fn is None:
            fn = build_forward_fn(self.layout, batch)
            self._fwd_cache[batch] = fn
        return fn

    def _grad_fn(self, batch):
        fn = self._grad_cache.get(batch)
        if fn is None:
            fn = build_grad_fn(self.layout, batch)
            self._grad_cache[batch] = fn
        return fn

    def forward(self, current_param, samples, f_at_samples, kwargs):
        # TODO(synk): a non-identity normalize_fn would need its VJP chained into the grad.
        x = jnp.asarray(self.normalize_fn(current_param, kwargs['experiment_id']),
                        jnp.float32)
        squeeze = (x.ndim == 1)
        x2 = x[None, :] if squeeze else x
        grad = self._grad_fn(x2.shape[0])(x2, self.packed)
        self.ctx['experiment_id'] = kwargs['experiment_id']
        self.ctx['last_samples'] = samples
        self.ctx['f_at_samples'] = f_at_samples
        return grad.reshape(x.shape)

    def query_lossproxy(self, parameter, expmode=None):
        if expmode is None:
            expmode = self.ctx['experiment_id']
        x = jnp.asarray(self.normalize_fn(parameter, expmode), jnp.float32)
        squeeze = (x.ndim == 1)
        x2 = x[None, :] if squeeze else x
        out = self._fwd_fn(x2.shape[0])(x2, self.packed)
        return jnp.squeeze(out)

    # TODO(synk): update() is a training step (criterion + torch optimizer); not a kernel.


# --------------------------------------------------------------------------------------
# Pure-JAX reference (correctness check)
# --------------------------------------------------------------------------------------
def ref_positional_encoding(t, n_enc):
    enc = [t]
    freqs = 2.0 ** jnp.arange(n_enc, dtype=t.dtype)
    for f in freqs:
        enc.append(jnp.sin(t * f))
        enc.append(jnp.cos(t * f))
    return jnp.concatenate(enc, axis=-1)


def ref_proxy(x, weights, biases, use_pe, n_enc):
    if use_pe:
        x = ref_positional_encoding(x, n_enc)
    for W, b in zip(weights, biases):
        x = _leaky_relu(x @ W + b)
    return x


if __name__ == "__main__":
    argdict = dict(device="tpu", is_logspace=False, criterion_proxy=None,
                   ndim=4, use_posEnc=True, num_encodings=6,
                   num_layers=3, num_neurons=32)
    normalize_fn = lambda p, experiment_id: p  # identity normalization

    key = jax.random.PRNGKey(0)
    kp, kc, ks, kf = jax.random.split(key, 4)
    model = NeuralProxyPallas(argdict, normalize_fn, kp)

    D, B = argdict['ndim'], 8
    current_param = jax.random.normal(kc, (D,), jnp.float32)
    samples = jax.random.normal(ks, (B, D), jnp.float32)
    f_at_samples = jax.random.uniform(kf, (B, 1), jnp.float32)

    grad = model.forward(current_param, samples, f_at_samples, {'experiment_id': 0})
    preds = model.query_lossproxy(samples)
    jax.block_until_ready((grad, preds))

    # sanity check against an independent pure-JAX reference (autodiff for the grad path)
    ref_loss = lambda p: ref_proxy(p[None, :], model.weights, model.biases,
                                   True, argdict['num_encodings'])[0, 0]
    ref_grad = jax.grad(ref_loss)(current_param)
    ref_preds = jnp.squeeze(ref_proxy(samples, model.weights, model.biases,
                                      True, argdict['num_encodings']))
    assert grad.shape == current_param.shape
    assert preds.shape == (B,)
    assert jnp.allclose(grad, ref_grad, rtol=1e-3, atol=1e-3)
    assert jnp.allclose(preds, ref_preds, rtol=1e-3, atol=1e-3)
    print("KERNEL_OK")
</pallas_src>

<mosaic_0001>
module attributes {stable_mosaic.version = 11 : i64} {
  func.func @kernel(%arg0: i32, %arg1: memref<8x4xf32, #tpu.memory_space<vmem>>, %arg2: memref<1336x128xf32, #tpu.memory_space<vmem>>, %arg3: memref<8x4xf32, #tpu.memory_space<vmem>>) attributes {dimension_semantics = [#tpu.dimension_semantics<parallel>], iteration_bounds = array<i64: 1>, scalar_prefetch = 0 : i64, scratch_operands = 0 : i64, tpu.core_type = #tpu.core_type<tc>, window_params = [{transform_indices = @transform_0, window_bounds = array<i64: 8, 4>}, {pipeline_mode = #tpu.pipeline_mode<synchronous>, transform_indices = @transform_1, window_bounds = array<i64: 1336, 128>}, {transform_indices = @transform_2, window_bounds = array<i64: 8, 4>}]} {
    %c0 = arith.constant 0 : index
    %c0_0 = arith.constant 0 : index
    %0 = vector.load %arg1[%c0, %c0_0] : memref<8x4xf32, #tpu.memory_space<vmem>>, vector<8x4xf32>
    %c784 = arith.constant 784 : index
    %c0_1 = arith.constant 0 : index
    %1 = vector.load %arg2[%c784, %c0_1] : memref<1336x128xf32, #tpu.memory_space<vmem>>, vector<1x128xf32>
    %c0_2 = arith.constant 0 : index
    %c0_3 = arith.constant 0 : index
    %2 = vector.load %arg2[%c0_2, %c0_3] : memref<1336x128xf32, #tpu.memory_space<vmem>>, vector<4x128xf32>
    %cst = arith.constant dense<0.000000e+00> : vector<8x128xf32>
    %3 = tpu.matmul %0, %2, %cst {dimension_numbers = #tpu.dot_dimension_numbers<[1], [0], [0], [1], [0, 0, 1, 1], [], []>} : vector<8x4xf32>, vector<4x128xf32>, vector<8x128xf32> -> vector<8x128xf32>
    %4 = math.sin %3 : vector<8x128xf32>
    %5 = math.cos %3 : vector<8x128xf32>
    %c136 = arith.constant 136 : index
    %c0_4 = arith.constant 0 : index
    %6 = vector.load %arg2[%c136, %c0_4] : memref<1336x128xf32, #tpu.memory_space<vmem>>, vector<4x128xf32>
    %c144 = arith.constant 144 : index
    %c0_5 = arith.constant 0 : index
    %7 = vector.load %arg2[%c144, %c0_5] : memref<1336x128xf32, #tpu.memory_space<vmem>>, vector<128x128xf32>
    %c272 = arith.constant 272 : index
    %c0_6 = arith.constant 0 : index
    %8 = vector.load %arg2[%c272, %c0_6] : memref<1336x128xf32, #tpu.memory_space<vmem>>, vector<128x128xf32>
    %cst_7 = arith.constant dense<0.000000e+00> : vector<8x128xf32>
    %9 = tpu.matmul %0, %6, %cst_7 {dimension_numbers = #tpu.dot_dimension_numbers<[1], [0], [0], [1], [0, 0, 1, 1], [], []>} : vector<8x4xf32>, vector<4x128xf32>, vector<8x128xf32> -> vector<8x128xf32>
    %cst_8 = arith.constant dense<0.000000e+00> : vector<8x128xf32>
    %10 = tpu.matmul %4, %7, %cst_8 {dimension_numbers = #tpu.dot_dimension_numbers<[1], [0], [0], [1], [0, 0, 1, 1], [], []>} : vector<8x128xf32>, vector<128x128xf32>, vector<8x128xf32> -> vector<8x128xf32>
    %11 = arith.addf %9, %10 : vector<8x128xf32>
    %cst_9 = arith.constant dense<0.000000e+00> : vector<8x128xf32>
    %12 = tpu.matmul %5, %8, %cst_9 {dimension_numbers = #tpu.dot_dimension_numbers<[1], [0], [0], [1], [0, 0, 1, 1], [], []>} : vector<8x128xf32>, vector<128x128xf32>, vector<8x128xf32> -> vector<8x128xf32>
    %13 = arith.addf %11, %12 : vector<8x128xf32>
    %14 = vector.broadcast %1 : vector<1x128xf32> to vector<8x128xf32>
    %15 = arith.addf %13, %14 : vector<8x128xf32>
    %cst_10 = arith.constant 0.000000e+00 : f32
    %16 = vector.broadcast %cst_10 : f32 to vector<8x128xf32>
    %17 = arith.cmpf ogt, %15, %16 : vector<8x128xf32>
    %cst_11 = arith.constant 0.00999999977 : f32
    %18 = vector.broadcast %cst_11 : f32 to vector<8x128xf32>
    %19 = arith.mulf %18, %15 : vector<8x128xf32>
    %20 = arith.select %17, %15, %19 : vector<8x128xi1>, vector<8x128xf32>
    %c792 = arith.constant 792 : index
    %c0_12 = arith.constant 0 : index
    %21 = vector.load %arg2[%c792, %c0_12] : memref<1336x128xf32, #tpu.memory_space<vmem>>, vector<128x128xf32>
    %c1048 = arith.constant 1048 : index
    %c0_13 = arith.constant 0 : index
    %22 = vector.load %arg2[%c1048, %c0_13] : memref<1336x128xf32, #tpu.memory_space<vmem>>, vector<1x128xf32>
    %cst_14 = arith.constant dense<0.000000e+00> : vector<8x128xf32>
    %23 = tpu.matmul %20, %21, %cst_14 {dimension_numbers = #tpu.dot_dimension_numbers<[1], [0], [0], [1], [0, 0, 1, 1], [], []>} : vector<8x128xf32>, vector<128x128xf32>, vector<8x128xf32> -> vector<8x128xf32>
    %24 = vector.broadcast %22 : vector<1x128xf32> to vector<8x128xf32>
    %25 = arith.addf %23, %24 : vector<8x128xf32>
    %cst_15 = arith.constant 0.000000e+00 : f32
    %26 = vector.broadcast %cst_15 : f32 to vector<8x128xf32>
    %27 = arith.cmpf ogt, %25, %26 : vector<8x128xf32>
    %cst_16 = arith.constant 0.00999999977 : f32
    %28 = vector.broadcast %cst_16 : f32 to vector<8x128xf32>
    %29 = arith.mulf %28, %25 : vector<8x128xf32>
    %30 = arith.select %27, %25, %29 : vector<8x128xi1>, vector<8x128xf32>
    %c1056 = arith.constant 1056 : index
    %c0_17 = arith.constant 0 : index
    %31 = vector.load %arg2[%c1056, %c0_17] : memref<1336x128xf32, #tpu.memory_space<vmem>>, vector<128x128xf32>
    %c1312 = arith.constant 1312 : index
    %c0_18 = arith.constant 0 : index
    %32 = vector.load %arg2[%c1312, %c0_18] : memref<1336x128xf32, #tpu.memory_space<vmem>>, vector<1x128xf32>
    %cst_19 = arith.constant dense<0.000000e+00> : vector<8x128xf32>
    %33 = tpu.matmul %30, %31, %cst_19 {dimension_numbers = #tpu.dot_dimension_numbers<[1], [0], [0], [1], [0, 0, 1, 1], [], []>} : vector<8x128xf32>, vector<128x128xf32>, vector<8x128xf32> -> vector<8x128xf32>
    %34 = vector.broadcast %32 : vector<1x128xf32> to vector<8x128xf32>
    %35 = arith.addf %33, %34 : vector<8x128xf32>
    %cst_20 = arith.constant 0.000000e+00 : f32
    %36 = vector.broadcast %cst_20 : f32 to vector<8x128xf32>
    %37 = arith.cmpf ogt, %35, %36 : vector<8x128xf32>
    %cst_21 = arith.constant 0.00999999977 : f32
    %38 = vector.broadcast %cst_21 : f32 to vector<8x128xf32>
    %39 = arith.mulf %38, %35 : vector<8x128xf32>
    %40 = arith.select %37, %35, %39 : vector<8x128xi1>, vector<8x128xf32>
    %c1320 = arith.constant 1320 : index
    %c0_22 = arith.constant 0 : index
    %41 = vector.load %arg2[%c1320, %c0_22] : memref<1336x128xf32, #tpu.memory_space<vmem>>, vector<1x128xf32>
    %c1328 = arith.constant 1328 : index
    %c0_23 = arith.constant 0 : index
    %42 = vector.load %arg2[%c1328, %c0_23] : memref<1336x128xf32, #tpu.memory_space<vmem>>, vector<1x128xf32>
    %43 = vector.extract_strided_slice %42 {offsets = [0, 0], sizes = [1, 1], strides = [1, 1]} : vector<1x128xf32> to vector<1x1xf32>
    %44 = vector.broadcast %41 : vector<1x128xf32> to vector<8x128xf32>
    %45 = arith.mulf %40, %44 : vector<8x128xf32>
    %cst_24 = arith.constant dense<0.000000e+00> : vector<8xf32>
    %46 = vector.multi_reduction <add>, %45, %cst_24 [1] : vector<8x128xf32> to vector<8xf32>
    %47 = vector.shape_cast %46 : vector<8xf32> to vector<8x1xf32>
    %48 = vector.broadcast %43 : vector<1x1xf32> to vector<8x1xf32>
    %49 = arith.addf %47, %48 : vector<8x1xf32>
    %cst_25 = arith.constant 0.000000e+00 : f32
    %50 = vector.broadcast %cst_25 : f32 to vector<8x1xf32>
    %51 = arith.cmpf ogt, %49, %50 : vector<8x1xf32>
    %cst_26 = arith.constant 1.000000e+00 : f32
    %cst_27 = arith.constant 0.00999999977 : f32
    %52 = vector.broadcast %cst_26 : f32 to vector<8x1xf32>
    %53 = vector.broadcast %cst_27 : f32 to vector<8x1xf32>
    %54 = arith.select %51, %52, %53 : vector<8x1xi1>, vector<8x1xf32>
    %55 = vector.broadcast %54 : vector<8x1xf32> to vector<8x128xf32>
    %56 = vector.broadcast %41 : vector<1x128xf32> to vector<8x128xf32>
    %57 = arith.mulf %55, %56 : vector<8x128xf32>
    %cst_28 = arith.constant 0.000000e+00 : f32
    %58 = vector.broadcast %cst_28 : f32 to vector<8x128xf32>
    %59 = arith.cmpf ogt, %35, %58 : vector<8x128xf32>
    %cst_29 = arith.constant 1.000000e+00 : f32
    %cst_30 = arith.constant 0.00999999977 : f32
    %60 = vector.broadcast %cst_29 : f32 to vector<8x128xf32>
    %61 = vector.broadcast %cst_30 : f32 to vector<8x128xf32>
    %62 = arith.select %59, %60, %61 : vector<8x128xi1>, vector<8x128xf32>
    %63 = arith.mulf %57, %62 : vector<8x128xf32>
    %c1184 = arith.constant 1184 : index
    %c0_31 = arith.constant 0 : index
    %64 = vector.load %arg2[%c1184, %c0_31] : memref<1336x128xf32, #tpu.memory_space<vmem>>, vector<128x128xf32>
    %cst_32 = arith.constant dense<0.000000e+00> : vector<8x128xf32>
    %65 = tpu.matmul %63, %64, %cst_32 {dimension_numbers = #tpu.dot_dimension_numbers<[1], [0], [0], [1], [0, 0, 1, 1], [], []>} : vector<8x128xf32>, vector<128x128xf32>, vector<8x128xf32> -> vector<8x128xf32>
    %cst_33 = arith.constant 0.000000e+00 : f32
    %66 = vector.broadcast %cst_33 : f32 to vector<8x128xf32>
    %67 = arith.cmpf ogt, %25, %66 : vector<8x128xf32>
    %cst_34 = arith.constant 1.000000e+00 : f32
    %cst_35 = arith.constant 0.00999999977 : f32
    %68 = vector.broadcast %cst_34 : f32 to vector<8x128xf32>
    %69 = vector.broadcast %cst_35 : f32 to vector<8x128xf32>
    %70 = arith.select %67, %68, %69 : vector<8x128xi1>, vector<8x128xf32>
    %71 = arith.mulf %65, %70 : vector<8x128xf32>
    %c920 = arith.constant 920 : index
    %c0_36 = arith.constant 0 : index
    %72 = vector.load %arg2[%c920, %c0_36] : memref<1336x128xf32, #tpu.memory_space<vmem>>, vector<128x128xf32>
    %cst_37 = arith.constant dense<0.000000e+00> : vector<8x128xf32>
    %73 = tpu.matmul %71, %72, %cst_37 {dimension_numbers = #tpu.dot_dimension_numbers<[1], [0], [0], [1], [0, 0, 1, 1], [], []>} : vector<8x128xf32>, vector<128x128xf32>, vector<8x128xf32> -> vector<8x128xf32>
    %cst_38 = arith.constant 0.000000e+00 : f32
    %74 = vector.broadcast %cst_38 : f32 to vector<8x128xf32>
    %75 = arith.cmpf ogt, %15, %74 : vector<8x128xf32>
    %cst_39 = arith.constant 1.000000e+00 : f32
    %cst_40 = arith.constant 0.00999999977 : f32
    %76 = vector.broadcast %cst_39 : f32 to vector<8x128xf32>
    %77 = vector.broadcast %cst_40 : f32 to vector<8x128xf32>
    %78 = arith.select %75, %76, %77 : vector<8x128xi1>, vector<8x128xf32>
    %79 = arith.mulf %73, %78 : vector<8x128xf32>
    %c400 = arith.constant 400 : index
    %c0_41 = arith.constant 0 : index
    %80 = vector.load %arg2[%c400, %c0_41] : memref<1336x128xf32, #tpu.memory_space<vmem>>, vector<128x128xf32>
    %c528 = arith.constant 528 : index
    %c0_42 = arith.constant 0 : index
    %81 = vector.load %arg2[%c528, %c0_42] : memref<1336x128xf32, #tpu.memory_space<vmem>>, vector<128x128xf32>
    %c656 = arith.constant 656 : index
    %c0_43 = arith.constant 0 : index
    %82 = vector.load %arg2[%c656, %c0_43] : memref<1336x128xf32, #tpu.memory_space<vmem>>, vector<128x128xf32>
    %cst_44 = arith.constant dense<0.000000e+00> : vector<8x128xf32>
    %83 = tpu.matmul %79, %80, %cst_44 {dimension_numbers = #tpu.dot_dimension_numbers<[1], [0], [0], [1], [0, 0, 1, 1], [], []>} : vector<8x128xf32>, vector<128x128xf32>, vector<8x128xf32> -> vector<8x128xf32>
    %cst_45 = arith.constant dense<0.000000e+00> : vector<8x128xf32>
    %84 = tpu.matmul %79, %81, %cst_45 {dimension_numbers = #tpu.dot_dimension_numbers<[1], [0], [0], [1], [0, 0, 1, 1], [], []>} : vector<8x128xf32>, vector<128x128xf32>, vector<8x128xf32> -> vector<8x128xf32>
    %cst_46 = arith.constant dense<0.000000e+00> : vector<8x128xf32>
    %85 = tpu.matmul %79, %82, %cst_46 {dimension_numbers = #tpu.dot_dimension_numbers<[1], [0], [0], [1], [0, 0, 1, 1], [], []>} : vector<8x128xf32>, vector<128x128xf32>, vector<8x128xf32> -> vector<8x128xf32>
    %86 = arith.mulf %84, %5 : vector<8x128xf32>
    %87 = arith.mulf %85, %4 : vector<8x128xf32>
    %88 = arith.subf %86, %87 : vector<8x128xf32>
    %c8 = arith.constant 8 : index
    %c0_47 = arith.constant 0 : index
    %89 = vector.load %arg2[%c8, %c0_47] : memref<1336x128xf32, #tpu.memory_space<vmem>>, vector<128x128xf32>
    %cst_48 = arith.constant dense<0.000000e+00> : vector<8x128xf32>
    %90 = tpu.matmul %88, %89, %cst_48 {dimension_numbers = #tpu.dot_dimension_numbers<[1], [0], [0], [1], [0, 0, 1, 1], [], []>} : vector<8x128xf32>, vector<128x128xf32>, vector<8x128xf32> -> vector<8x128xf32>
    %91 = arith.addf %83, %90 : vector<8x128xf32>
    %92 = vector.extract_strided_slice %91 {offsets = [0, 0], sizes = [8, 4], strides = [1, 1]} : vector<8x128xf32> to vector<8x4xf32>
    %c0_49 = arith.constant 0 : index
    %c0_50 = arith.constant 0 : index
    %93 = vector.load %arg3[%c0_49, %c0_50] : memref<8x4xf32, #tpu.memory_space<vmem>>, vector<8x4xf32>
    tpu.vector_store %arg3[%c0_49, %c0_50], %92 {strides = array<i32>} : memref<8x4xf32, #tpu.memory_space<vmem>>, vector<8x4xf32>,
    return
  }
  func.func @transform_0(%arg0: i32) -> (i32, i32) {
    %c0_i32 = arith.constant 0 : i32
    %c0_i32_0 = arith.constant 0 : i32
    return %arg0, %c0_i32 : i32, i32
  }
  func.func @transform_1(%arg0: i32) -> (i32, i32) {
    %c0_i32 = arith.constant 0 : i32
    %c0_i32_0 = arith.constant 0 : i32
    %c0_i32_1 = arith.constant 0 : i32
    return %c0_i32, %c0_i32_0 : i32, i32
  }
  func.func @transform_2(%arg0: i32) -> (i32, i32) {
    %c0_i32 = arith.constant 0 : i32
    %c0_i32_0 = arith.constant 0 : i32
    return %arg0, %c0_i32 : i32, i32
  }
}

</mosaic_0001>

<llo_original>
// kernel: fn.1
$region0: #{fn.1}
  #allocation0 [shape = 'u32[]', space=smem, size = 0x4, offset = 0x4, fixed_abs, tag = 'smem constant byte address 0x4 - core index']
  #allocation1 [shape = 'u32[144,128]{1,0:T(1,128)}', space=vmem, size = 0x12000, scoped, tag = 'internal scratch']
  %s0 = inlined_call_operand.vmem [shape: f32[8,4], index: 0, kind: input, shape index: {}]
  %s1 = inlined_call_operand.hbm [shape: f32[1336,128], index: 1, kind: input, shape index: {}]
  %s2 = inlined_call_operand.vmem [shape: f32[8,4], index: 2, kind: output, shape index: {}]
  %s3 = sld [smem:[#allocation0]]
  $region22: #{fn.1} parent=0
    _
  %s5 = ssub.s32 1, %s3
  %s6 = scalar_select 0, %s5, %s3
  $region1: #{fn.1} parent=0
    #allocation2 [shape = 'u8[684032]{0}', space=vmem, size = 0xa7000, scoped, tag = 'input window, operand 1, single buffered']
    #allocation3 [shape = 's32[1]{0}', space=sflag, size = 0x4, scoped, tag = 'scoped memory for fn.1']
    %7 = vsyncpa [#allocation3], 0
    // Predicated region
    $region2: #{fn.1} parent=1 // pred_check
      _
    $region3: #{fn.1} parent=1 // pred_check_branch
      %9 = sbr.rel (0) target = $region5
    $region4: #{fn.1} parent=1 // pred_region
      _
    $region5: #{fn.1} parent=1 // pred_fallthru
      _
    // Predicated region
    $region6: #{fn.1} parent=1 // pred_check
      _
    $region7: #{fn.1} parent=1 // pred_check_branch
      %11 = sbr.rel (0) target = $region9
    $region8: #{fn.1} parent=1 // pred_region
      %s13 = ssub.s32 21376, 21376
      %14 = vsyncadd [#allocation3], %s13
      %s15 = sshll.u32 [#allocation2], 4
      %s16 = int_to_ptr.vmem [resolvable:$true] %s15
      %21 = dma.hbm_to_vmem [thread:$0]  %s1, 21376, %s16, [#allocation3], 128, 128, 8
    $region9: #{fn.1} parent=1 // pred_fallthru
      _
    // Predicated region
    $region10: #{fn.1} parent=1 // pred_check
      _
    $region11: #{fn.1} parent=1 // pred_check_branch
      %23 = sbr.rel (0) target = $region13
    $region12: #{fn.1} parent=1 // pred_region
      %24 = dma.done [#allocation3], 21376
    $region13: #{fn.1} parent=1 // pred_fallthru
      _
    %v25 = vld [vmem:[%s0] sm:$0xff]
    %v26 = vld [vmem:[#allocation2 + $0x310] sm:$0x1]
    %v27 = vld [vmem:[#allocation2] sm:$0xf]
    %vm28 = vcmask 31744
    %v30 = vsel %vm28, %v25, 0
    %vm32 = vcmask 1043456
    %v34 = vsel %vm32, %v27, 0
    %36 = vmatprep.subr.mxu0 0.0
    %37 = vmatpush1.msra.mxu0 %v34
    %38 = vmatprep.subr.mxu0 0.0
    %39 = vmatpush1.msra.mxu0 0.0
    %40 = vmatprep.subr.mxu0 0.0
    %41 = vmatpush1.msra.mxu0 0.0
    %42 = vmatprep.subr.mxu0 0.0
    %43 = vmatpush1.msra.mxu0 0.0
    %44 = vmatprep.subr.mxu0 0.0
    %45 = vmatpush1.msra.mxu0 0.0
    %46 = vmatprep.subr.mxu0 0.0
    %47 = vmatpush1.msra.mxu0 0.0
    %48 = vmatprep.subr.mxu0 0.0
    %49 = vmatpush1.msra.mxu0 0.0
    %50 = vmatprep.subr.mxu0 0.0
    %51 = vmatpush1.msra.mxu0 0.0
    %52 = vmatprep.subr.mxu0 0.0
    %53 = vmatpush1.msra.mxu0 0.0
    %54 = vmatprep.subr.mxu0 0.0
    %55 = vmatpush1.msra.mxu0 0.0
    %56 = vmatprep.subr.mxu0 0.0
    %57 = vmatpush1.msra.mxu0 0.0
    %58 = vmatprep.subr.mxu0 0.0
    %59 = vmatpush1.msra.mxu0 0.0
    %60 = vmatprep.subr.mxu0 0.0
    %61 = vmatpush1.msra.mxu0 0.0
    %62 = vmatprep.subr.mxu0 0.0
    %63 = vmatpush1.msra.mxu0 0.0
    %64 = vmatprep.subr.mxu0 0.0
    %65 = vmatpush1.msra.mxu0 0.0
    %66 = vmatprep.subr.mxu0 0.0
    %67 = vmatpush1.msra.mxu0 0.0
    %68 = vmatprep.subr.mxu0 0.0
    %69 = vmatpush1.msra.mxu0 0.0
    %70 = vmatprep.subr.mxu0 0.0
    %71 = vmatpush1.msra.mxu0 0.0
    %72 = vmatprep.subr.mxu0 0.0
    %73 = vmatpush1.msra.mxu0 0.0
    %74 = vmatprep.subr.mxu0 0.0
    %75 = vmatpush1.msra.mxu0 0.0
    %76 = vmatprep.subr.mxu0 0.0
    %77 = vmatpush1.msra.mxu0 0.0
    %78 = vmatprep.subr.mxu0 0.0
    %79 = vmatpush1.msra.mxu0 0.0
    %80 = vmatprep.subr.mxu0 0.0
    %81 = vmatpush1.msra.mxu0 0.0
    %82 = vmatprep.subr.mxu0 0.0
    %83 = vmatpush1.msra.mxu0 0.0
    %84 = vmatprep.subr.mxu0 0.0
    %85 = vmatpush1.msra.mxu0 0.0
    %86 = vmatprep.subr.mxu0 0.0
    %87 = vmatpush1.msra.mxu0 0.0
    %88 = vmatprep.subr.mxu0 0.0
    %89 = vmatpush1.msra.mxu0 0.0
    %90 = vmatprep.subr.mxu0 0.0
    %91 = vmatpush1.msra.mxu0 0.0
    %92 = vmatprep.subr.mxu0 0.0
    %93 = vmatpush1.msra.mxu0 0.0
    %94 = vmatprep.subr.mxu0 0.0
    %95 = vmatpush1.msra.mxu0 0.0
    %96 = vmatprep.subr.mxu0 0.0
    %97 = vmatpush1.msra.mxu0 0.0
    %98 = vmatprep.subr.mxu0 0.0
    %99 = vmatpush1.msra.mxu0 0.0
    %100 = vmatprep.mubr.f32.mxu0 0.0
    %101 = vmatmul.mubr.f32.gmra.mrb[0].mxu0 %v30
    %v102 = vpop.f32.mrb[0].mxu0
    %v103 = vadd.f32 0.0, %v102
    %v104 = vpop.f32.mrb[0].mxu0
    %105 = vdwg.mxu0
    %v106 = vand.u32 2147483647, %v103
    %vm107 = vcmp.le.f32.partialorder %v106, 0.7853982
    %vm108 = vcmp.lt.s32.totalorder %v103, 0
    %v109 = vand.u32 %v103, 2139095040
    %v110 = vshrl.u32 %v109, 23
    %v111 = vsub.s32 %v110, 127
    %v112 = vand.u32 2147483647, %v103
    %v113 = vand.u32 %v112, 8388607
    %v114 = vor.u32 %v113, 8388608
    %v115 = vsub.s32 0, %v114
    %v116 = vadd.s32 %v111, 1
    %vm117 = vcmp.gt.s32.totalorder %v116, 0
    %v118 = vsel %vm117, %v116, 0
    %v119 = vshrl.u32 %v118, 5
    %v120 = vand.u32 %v118, 31
    %v121 = vsub.s32 32, %v120
    %v122 = vshrl.u32 683565275, %v121
    %v123 = vshll.u32 683565275, %v120
    %v124 = vshrl.u32 2475754826, %v121
    %v125 = vor.u32 %v123, %v124
    %v126 = vshll.u32 2475754826, %v120
    %v127 = vshrl.u32 2131351028, %v121
    %v128 = vor.u32 %v126, %v127
    %v129 = vshll.u32 2131351028, %v120
    %v130 = vshrl.u32 2102212464, %v121
    %v131 = vor.u32 %v129, %v130
    %v132 = vshll.u32 2102212464, %v120
    %v133 = vshrl.u32 920167782, %v121
    %v134 = vor.u32 %v132, %v133
    %v135 = vshll.u32 920167782, %v120
    %v136 = vshrl.u32 1326507024, %v121
    %v137 = vor.u32 %v135, %v136
    %vm138 = vcmp.lt.s32.totalorder %v119, 1
    %vm139 = vcmp.lt.s32.totalorder %v119, 2
    %vm140 = vcmp.lt.s32.totalorder %v119, 3
    %vm141 = vcmp.lt.s32.totalorder %v119, 4
    %v142 = vsel %vm138, %v122, %v125
    %v143 = vsel %vm141, %v131, 2102212464
    %v144 = vsel %vm140, %v128, %v143
    %v145 = vsel %vm139, %v142, %v144
    %v146 = vsel %vm138, %v125, %v128
    %v147 = vsel %vm141, %v134, 920167782
    %v148 = vsel %vm140, %v131, %v147
    %v149 = vsel %vm139, %v146, %v148
    %v150 = vsel %vm138, %v128, %v131
    %v151 = vsel %vm141, %v137, 1326507024
    %v152 = vsel %vm140, %v134, %v151
    %v153 = vsel %vm139, %v150, %v152
    %v154 = vshll.u32 %v114, 8
    %v155 = vmul.u32.u64.compose %v154, %v153
    %v156 = vextract.low.u32 %v155
    %v157 = vextract.high.u32 %v155
    %v158 = vmul.u32.u64.compose %v154, %v149
    %v159 = vextract.low.u32 %v158
    %v160 = vextract.high.u32 %v158
    %v161 = vmul.u32 %v154, %v145
    %v162 = vadd.s32 %v157, %v159
    %vm163 = vc.u32 %v157, %v159
    %v164 = vadd.s32 %v160, 1
    %v165 = vsel %vm163, %v164, %v160
    %v166 = vadd.s32 %v161, %v165
    %v167 = vadd.s32 %v166, 536870912
    %v168 = vshrl.u32 %v167, 30
    %v169 = vshll.u32 %v168, 30
    %v170 = vsub.s32 %v166, %v169
    %vm171 = vcmp.lt.s32.totalorder %v170, 0
    %v172 = vsub.s32 0, %v170
    %v173 = vsel %vm171, %v172, %v170
    %v174 = vclz %v173
    %v175 = vsub.s32 %v174, 2
    %vm176 = vcmp.gt.s32.totalorder 0, %v175
    %v177 = vsel %vm176, 0, %v175
    %v178 = vsub.s32 32, %v177
    %v179 = vshll.u32 %v170, %v177
    %v180 = vshrl.u32 %v162, %v178
    %v181 = vor.u32 %v179, %v180
    %v182 = vsub.s32 4294967266, %v177
    %v183 = vadd.s32 %v182, 127
    %v184 = vshll.u32 %v183, 23
    %v185 = vor.u32 4788187, %v184
    %v186 = vand.u32 2147483647, %v185
    %v188 = vcvt.s32.f32 %v181
    %v189 = vmul.f32 %v188, %v186
    %v190 = vxor.u32 %v189, 2147483648
    %v191 = vsel %vm108, %v190, %v189
    %v192 = vsub.s32 4, %v168
    %v193 = vsel %vm108, %v192, %v168
    %v194 = vsel %vm107, %v103, %v191
    %v195 = vsel %vm107, 0, %v193
    %v196 = vcosq.f32.pop %v194
    %v197 = vsinq.f32.pop %v194
    %vm198 = vweird.f32 %v103
    %v199 = vadd.s32 %v195, 3
    %v200 = vand.u32 %v199, 3
    %vm201 = vcmp.lt.s32.totalorder %v200, 2
    %vm202 = vcmp.eq.s32.totalorder %v200, 0
    %v203 = vxor.u32 %v197, 2147483648
    %v204 = vsel %vm202, %v196, %v203
    %vm205 = vcmp.eq.s32.totalorder %v200, 2
    %v206 = vxor.u32 %v196, 2147483648
    %v207 = vsel %vm205, %v206, %v197
    %v208 = vsel %vm201, %v204, %v207
    %v209 = vsel %vm198, nan, %v208
    %v210 = vand.u32 2147483647, %v103
    %vm211 = vcmp.le.f32.partialorder %v210, 0.7853982
    %vm212 = vcmp.lt.s32.totalorder %v103, 0
    %v213 = vand.u32 %v103, 2139095040
    %v214 = vshrl.u32 %v213, 23
    %v215 = vsub.s32 %v214, 127
    %v216 = vand.u32 2147483647, %v103
    %v217 = vand.u32 %v216, 8388607
    %v218 = vor.u32 %v217, 8388608
    %v219 = vsub.s32 0, %v218
    %v220 = vadd.s32 %v215, 1
    %vm221 = vcmp.gt.s32.totalorder %v220, 0
    %v222 = vsel %vm221, %v220, 0
    %v223 = vshrl.u32 %v222, 5
    %v224 = vand.u32 %v222, 31
    %v225 = vsub.s32 32, %v224
    %v226 = vshrl.u32 683565275, %v225
    %v227 = vshll.u32 683565275, %v224
    %v228 = vshrl.u32 2475754826, %v225
    %v229 = vor.u32 %v227, %v228
    %v230 = vshll.u32 2475754826, %v224
    %v231 = vshrl.u32 2131351028, %v225
    %v232 = vor.u32 %v230, %v231
    %v233 = vshll.u32 2131351028, %v224
    %v234 = vshrl.u32 2102212464, %v225
    %v235 = vor.u32 %v233, %v234
    %v236 = vshll.u32 2102212464, %v224
    %v237 = vshrl.u32 920167782, %v225
    %v238 = vor.u32 %v236, %v237
    %v239 = vshll.u32 920167782, %v224
    %v240 = vshrl.u32 1326507024, %v225
    %v241 = vor.u32 %v239, %v240
    %vm242 = vcmp.lt.s32.totalorder %v223, 1
    %vm243 = vcmp.lt.s32.totalorder %v223, 2
    %vm244 = vcmp.lt.s32.totalorder %v223, 3
    %vm245 = vcmp.lt.s32.totalorder %v223, 4
    %v246 = vsel %vm242, %v226, %v229
    %v247 = vsel %vm245, %v235, 2102212464
    %v248 = vsel %vm244, %v232, %v247
    %v249 = vsel %vm243, %v246, %v248
    %v250 = vsel %vm242, %v229, %v232
    %v251 = vsel %vm245, %v238, 920167782
    %v252 = vsel %vm244, %v235, %v251
    %v253 = vsel %vm243, %v250, %v252
    %v254 = vsel %vm242, %v232, %v235
    %v255 = vsel %vm245, %v241, 1326507024
    %v256 = vsel %vm244, %v238, %v255
    %v257 = vsel %vm243, %v254, %v256
    %v258 = vshll.u32 %v218, 8
    %v259 = vmul.u32.u64.compose %v258, %v257
    %v260 = vextract.low.u32 %v259
    %v261 = vextract.high.u32 %v259
    %v262 = vmul.u32.u64.compose %v258, %v253
    %v263 = vextract.low.u32 %v262
    %v264 = vextract.high.u32 %v262
    %v265 = vmul.u32 %v258, %v249
    %v266 = vadd.s32 %v261, %v263
    %vm267 = vc.u32 %v261, %v263
    %v268 = vadd.s32 %v264, 1
    %v269 = vsel %vm267, %v268, %v264
    %v270 = vadd.s32 %v265, %v269
    %v271 = vadd.s32 %v270, 536870912
    %v272 = vshrl.u32 %v271, 30
    %v273 = vshll.u32 %v272, 30
    %v274 = vsub.s32 %v270, %v273
    %vm275 = vcmp.lt.s32.totalorder %v274, 0
    %v276 = vsub.s32 0, %v274
    %v277 = vsel %vm275, %v276, %v274
    %v278 = vclz %v277
    %v279 = vsub.s32 %v278, 2
    %vm280 = vcmp.gt.s32.totalorder 0, %v279
    %v281 = vsel %vm280, 0, %v279
    %v282 = vsub.s32 32, %v281
    %v283 = vshll.u32 %v274, %v281
    %v284 = vshrl.u32 %v266, %v282
    %v285 = vor.u32 %v283, %v284
    %v286 = vsub.s32 4294967266, %v281
    %v287 = vadd.s32 %v286, 127
    %v288 = vshll.u32 %v287, 23
    %v289 = vor.u32 4788187, %v288
    %v290 = vand.u32 2147483647, %v289
    %v292 = vcvt.s32.f32 %v285
    %v293 = vmul.f32 %v292, %v290
    %v294 = vxor.u32 %v293, 2147483648
    %v295 = vsel %vm212, %v294, %v293
    %v296 = vsub.s32 4, %v272
    %v297 = vsel %vm212, %v296, %v272
    %v298 = vsel %vm211, %v103, %v295
    %v299 = vsel %vm211, 0, %v297
    %v300 = vcosq.f32.pop %v298
    %v301 = vsinq.f32.pop %v298
    %vm302 = vweird.f32 %v103
    %v303 = vand.u32 %v299, 3
    %vm304 = vcmp.lt.s32.totalorder %v303, 2
    %vm305 = vcmp.eq.s32.totalorder %v303, 0
    %v306 = vxor.u32 %v301, 2147483648
    %v307 = vsel %vm305, %v300, %v306
    %vm308 = vcmp.eq.s32.totalorder %v303, 2
    %v309 = vxor.u32 %v300, 2147483648
    %v310 = vsel %vm308, %v309, %v301
    %v311 = vsel %vm304, %v307, %v310
    %v312 = vsel %vm302, nan, %v311
    %v313 = vld [vmem:[#allocation2 + $0x88] sm:$0xf]
    %v314 = vld [vmem:[#allocation2 + $0x90] sm:$0xff]
    %v315 = vld [vmem:[#allocation2 + $0x98] sm:$0xff]
    %v316 = vld [vmem:[#allocation2 + $0xa0] sm:$0xff]
    %v317 = vld [vmem:[#allocation2 + $0xa8] sm:$0xff]
    %v318 = vld [vmem:[#allocation2 + $0xb0] sm:$0xff]
    %v319 = vld [vmem:[#allocation2 + $0xb8] sm:$0xff]
    %v320 = vld [vmem:[#allocation2 + $0xc0] sm:$0xff]
    %v321 = vld [vmem:[#allocation2 + $0xc8] sm:$0xff]
    %v322 = vld [vmem:[#allocation2 + $0xd0] sm:$0xff]
    %v323 = vld [vmem:[#allocation2 + $0xd8] sm:$0xff]
    %v324 = vld [vmem:[#allocation2 + $0xe0] sm:$0xff]
    %v325 = vld [vmem:[#allocation2 + $0xe8] sm:$0xff]
    %v326 = vld [vmem:[#allocation2 + $0xf0] sm:$0xff]
    %v327 = vld [vmem:[#allocation2 + $0xf8] sm:$0xff]
    %v328 = vld [vmem:[#allocation2 + $0x100] sm:$0xff]
    %v329 = vld [vmem:[#allocation2 + $0x108] sm:$0xff]
    %v330 = vld [vmem:[#allocation2 + $0x110] sm:$0xff]
    %v331 = vld [vmem:[#allocation2 + $0x118] sm:$0xff]
    %v332 = vld [vmem:[#allocation2 + $0x120] sm:$0xff]
    %v333 = vld [vmem:[#allocation2 + $0x128] sm:$0xff]
    %v334 = vld [vmem:[#allocation2 + $0x130] sm:$0xff]
    %v335 = vld [vmem:[#allocation2 + $0x138] sm:$0xff]
    %v336 = vld [vmem:[#allocation2 + $0x140] sm:$0xff]
    %v337 = vld [vmem:[#allocation2 + $0x148] sm:$0xff]
    %v338 = vld [vmem:[#allocation2 + $0x150] sm:$0xff]
    %v339 = vld [vmem:[#allocation2 + $0x158] sm:$0xff]
    %v340 = vld [vmem:[#allocation2 + $0x160] sm:$0xff]
    %v341 = vld [vmem:[#allocation2 + $0x168] sm:$0xff]
    %v342 = vld [vmem:[#allocation2 + $0x170] sm:$0xff]
    %v343 = vld [vmem:[#allocation2 + $0x178] sm:$0xff]
    %v344 = vld [vmem:[#allocation2 + $0x180] sm:$0xff]
    %v345 = vld [vmem:[#allocation2 + $0x188] sm:$0xff]
    %346 = vmatprep.subr.mxu0 0.0
    %347 = vmatpush1.msra.mxu0 %v314
    %348 = vmatprep.subr.mxu0 0.0
    %349 = vmatpush1.msra.mxu0 %v315
    %350 = vmatprep.subr.mxu0 0.0
    %351 = vmatpush1.msra.mxu0 %v316
    %352 = vmatprep.subr.mxu0 0.0
    %353 = vmatpush1.msra.mxu0 %v317
    %354 = vmatprep.subr.mxu0 0.0
    %355 = vmatpush1.msra.mxu0 %v318
    %356 = vmatprep.subr.mxu0 0.0
    %357 = vmatpush1.msra.mxu0 %v319
    %358 = vmatprep.subr.mxu0 0.0
    %359 = vmatpush1.msra.mxu0 %v320
    %360 = vmatprep.subr.mxu0 0.0
    %361 = vmatpush1.msra.mxu0 %v321
    %362 = vmatprep.subr.mxu0 0.0
    %363 = vmatpush1.msra.mxu0 %v322
    %364 = vmatprep.subr.mxu0 0.0
    %365 = vmatpush1.msra.mxu0 %v323
    %366 = vmatprep.subr.mxu0 0.0
    %367 = vmatpush1.msra.mxu0 %v324
    %368 = vmatprep.subr.mxu0 0.0
    %369 = vmatpush1.msra.mxu0 %v325
    %370 = vmatprep.subr.mxu0 0.0
    %371 = vmatpush1.msra.mxu0 %v326
    %372 = vmatprep.subr.mxu0 0.0
    %373 = vmatpush1.msra.mxu0 %v327
    %374 = vmatprep.subr.mxu0 0.0
    %375 = vmatpush1.msra.mxu0 %v328
    %376 = vmatprep.subr.mxu0 0.0
    %377 = vmatpush1.msra.mxu0 %v329
    %378 = vmatprep.subr.mxu0 0.0
    %379 = vmatpush1.msra.mxu0 0.0
    %380 = vmatprep.subr.mxu0 0.0
    %381 = vmatpush1.msra.mxu0 0.0
    %382 = vmatprep.subr.mxu0 0.0
    %383 = vmatpush1.msra.mxu0 0.0
    %384 = vmatprep.subr.mxu0 0.0
    %385 = vmatpush1.msra.mxu0 0.0
    %386 = vmatprep.subr.mxu0 0.0
    %387 = vmatpush1.msra.mxu0 0.0
    %388 = vmatprep.subr.mxu0 0.0
    %389 = vmatpush1.msra.mxu0 0.0
    %390 = vmatprep.subr.mxu0 0.0
    %391 = vmatpush1.msra.mxu0 0.0
    %392 = vmatprep.subr.mxu0 0.0
    %393 = vmatpush1.msra.mxu0 0.0
    %394 = vmatprep.subr.mxu0 0.0
    %395 = vmatpush1.msra.mxu0 0.0
    %396 = vmatprep.subr.mxu0 0.0
    %397 = vmatpush1.msra.mxu0 0.0
    %398 = vmatprep.subr.mxu0 0.0
    %399 = vmatpush1.msra.mxu0 0.0
    %400 = vmatprep.subr.mxu0 0.0
    %401 = vmatpush1.msra.mxu0 0.0
    %402 = vmatprep.subr.mxu0 0.0
    %403 = vmatpush1.msra.mxu0 0.0
    %404 = vmatprep.subr.mxu0 0.0
    %405 = vmatpush1.msra.mxu0 0.0
    %406 = vmatprep.subr.mxu0 0.0
    %407 = vmatpush1.msra.mxu0 0.0
    %408 = vmatprep.subr.mxu0 0.0
    %409 = vmatpush1.msra.mxu0 0.0
    %410 = vmatprep.mubr.f32.mxu0 0.0
    %411 = vmatmul.mubr.f32.gmra.mrb[0].mxu0 %v209
    %v412 = vpop.f32.mrb[0].mxu0
    %v413 = vadd.f32 0.0, %v412
    %v414 = vpop.f32.mrb[0].mxu0
    %415 = vdwg.mxu0
    %v417 = vsel %vm32, %v313, 0
    %419 = vmatprep.subr.mxu0 0.0
    %420 = vmatpush1.msra.mxu0 %v417
    %421 = vmatprep.subr.mxu0 0.0
    %422 = vmatpush1.msra.mxu0 0.0
    %423 = vmatprep.subr.mxu0 0.0
    %424 = vmatpush1.msra.mxu0 0.0
    %425 = vmatprep.subr.mxu0 0.0
    %426 = vmatpush1.msra.mxu0 0.0
    %427 = vmatprep.subr.mxu0 0.0
    %428 = vmatpush1.msra.mxu0 0.0
    %429 = vmatprep.subr.mxu0 0.0
    %430 = vmatpush1.msra.mxu0 0.0
    %431 = vmatprep.subr.mxu0 0.0
    %432 = vmatpush1.msra.mxu0 0.0
    %433 = vmatprep.subr.mxu0 0.0
    %434 = vmatpush1.msra.mxu0 0.0
    %435 = vmatprep.subr.mxu0 0.0
    %436 = vmatpush1.msra.mxu0 0.0
    %437 = vmatprep.subr.mxu0 0.0
    %438 = vmatpush1.msra.mxu0 0.0
    %439 = vmatprep.subr.mxu0 0.0
    %440 = vmatpush1.msra.mxu0 0.0
    %441 = vmatprep.subr.mxu0 0.0
    %442 = vmatpush1.msra.mxu0 0.0
    %443 = vmatprep.subr.mxu0 0.0
    %444 = vmatpush1.msra.mxu0 0.0
    %445 = vmatprep.subr.mxu0 0.0
    %446 = vmatpush1.msra.mxu0 0.0
    %447 = vmatprep.subr.mxu0 0.0
    %448 = vmatpush1.msra.mxu0 0.0
    %449 = vmatprep.subr.mxu0 0.0
    %450 = vmatpush1.msra.mxu0 0.0
    %451 = vmatprep.subr.mxu0 0.0
    %452 = vmatpush1.msra.mxu0 0.0
    %453 = vmatprep.subr.mxu0 0.0
    %454 = vmatpush1.msra.mxu0 0.0
    %455 = vmatprep.subr.mxu0 0.0
    %456 = vmatpush1.msra.mxu0 0.0
    %457 = vmatprep.subr.mxu0 0.0
    %458 = vmatpush1.msra.mxu0 0.0
    %459 = vmatprep.subr.mxu0 0.0
    %460 = vmatpush1.msra.mxu0 0.0
    %461 = vmatprep.subr.mxu0 0.0
    %462 = vmatpush1.msra.mxu0 0.0
    %463 = vmatprep.subr.mxu0 0.0
    %464 = vmatpush1.msra.mxu0 0.0
    %465 = vmatprep.subr.mxu0 0.0
    %466 = vmatpush1.msra.mxu0 0.0
    %467 = vmatprep.subr.mxu0 0.0
    %468 = vmatpush1.msra.mxu0 0.0
    %469 = vmatprep.subr.mxu0 0.0
    %470 = vmatpush1.msra.mxu0 0.0
    %471 = vmatprep.subr.mxu0 0.0
    %472 = vmatpush1.msra.mxu0 0.0
    %473 = vmatprep.subr.mxu0 0.0
    %474 = vmatpush1.msra.mxu0 0.0
    %475 = vmatprep.subr.mxu0 0.0
    %476 = vmatpush1.msra.mxu0 0.0
    %477 = vmatprep.subr.mxu0 0.0
    %478 = vmatpush1.msra.mxu0 0.0
    %479 = vmatprep.subr.mxu0 0.0
    %480 = vmatpush1.msra.mxu0 0.0
    %481 = vmatprep.subr.mxu0 0.0
    %482 = vmatpush1.msra.mxu0 0.0
    %483 = vmatprep.mubr.f32.mxu0 0.0
    %484 = vmatmul.mubr.f32.gmra.mrb[0].mxu0 %v30
    %v485 = vpop.f32.mrb[0].mxu0
    %v486 = vadd.f32 %v413, %v485
    %v487 = vpop.f32.mrb[0].mxu0
    %488 = vdwg.mxu0
    %489 = vmatprep.subr.mxu0 0.0
    %490 = vmatpush1.msra.mxu0 %v330
    %491 = vmatprep.subr.mxu0 0.0
    %492 = vmatpush1.msra.mxu0 %v331
    %493 = vmatprep.subr.mxu0 0.0
    %494 = vmatpush1.msra.mxu0 %v332
    %495 = vmatprep.subr.mxu0 0.0
    %496 = vmatpush1.msra.mxu0 %v333
    %497 = vmatprep.subr.mxu0 0.0
    %498 = vmatpush1.msra.mxu0 %v334
    %499 = vmatprep.subr.mxu0 0.0
    %500 = vmatpush1.msra.mxu0 %v335
    %501 = vmatprep.subr.mxu0 0.0
    %502 = vmatpush1.msra.mxu0 %v336
    %503 = vmatprep.subr.mxu0 0.0
    %504 = vmatpush1.msra.mxu0 %v337
    %505 = vmatprep.subr.mxu0 0.0
    %506 = vmatpush1.msra.mxu0 %v338
    %507 = vmatprep.subr.mxu0 0.0
    %508 = vmatpush1.msra.mxu0 %v339
    %509 = vmatprep.subr.mxu0 0.0
    %510 = vmatpush1.msra.mxu0 %v340
    %511 = vmatprep.subr.mxu0 0.0
    %512 = vmatpush1.msra.mxu0 %v341
    %513 = vmatprep.subr.mxu0 0.0
    %514 = vmatpush1.msra.mxu0 %v342
    %515 = vmatprep.subr.mxu0 0.0
    %516 = vmatpush1.msra.mxu0 %v343
    %517 = vmatprep.subr.mxu0 0.0
    %518 = vmatpush1.msra.mxu0 %v344
    %519 = vmatprep.subr.mxu0 0.0
    %520 = vmatpush1.msra.mxu0 %v345
    %521 = vmatprep.subr.mxu0 0.0
    %522 = vmatpush1.msra.mxu0 0.0
    %523 = vmatprep.subr.mxu0 0.0
    %524 = vmatpush1.msra.mxu0 0.0
    %525 = vmatprep.subr.mxu0 0.0
    %526 = vmatpush1.msra.mxu0 0.0
    %527 = vmatprep.subr.mxu0 0.0
    %528 = vmatpush1.msra.mxu0 0.0
    %529 = vmatprep.subr.mxu0 0.0
    %530 = vmatpush1.msra.mxu0 0.0
    %531 = vmatprep.subr.mxu0 0.0
    %532 = vmatpush1.msra.mxu0 0.0
    %533 = vmatprep.subr.mxu0 0.0
    %534 = vmatpush1.msra.mxu0 0.0
    %535 = vmatprep.subr.mxu0 0.0
    %536 = vmatpush1.msra.mxu0 0.0
    %537 = vmatprep.subr.mxu0 0.0
    %538 = vmatpush1.msra.mxu0 0.0
    %539 = vmatprep.subr.mxu0 0.0
    %540 = vmatpush1.msra.mxu0 0.0
    %541 = vmatprep.subr.mxu0 0.0
    %542 = vmatpush1.msra.mxu0 0.0
    %543 = vmatprep.subr.mxu0 0.0
    %544 = vmatpush1.msra.mxu0 0.0
    %545 = vmatprep.subr.mxu0 0.0
    %546 = vmatpush1.msra.mxu0 0.0
    %547 = vmatprep.subr.mxu0 0.0
    %548 = vmatpush1.msra.mxu0 0.0
    %549 = vmatprep.subr.mxu0 0.0
    %550 = vmatpush1.msra.mxu0 0.0
    %551 = vmatprep.subr.mxu0 0.0
    %552 = vmatpush1.msra.mxu0 0.0
    %553 = vmatprep.mubr.f32.mxu0 0.0
    %554 = vmatmul.mubr.f32.gmra.mrb[0].mxu0 %v312
    %v555 = vpop.f32.mrb[0].mxu0
    %v556 = vadd.f32 0.0, %v555
    %v557 = vpop.f32.mrb[0].mxu0
    %558 = vdwg.mxu0
    %v559 = vadd.f32 %v486, %v556
    %v560 = vlaneseq
    %v561 = vshrl.u32 %v560, 7
    %v562 = vsub.s32 0, %v561
    %v563 = vrot.slane %v26, %v562
    %v564 = vadd.f32 %v559, %v563
    %vm565 = vcmp.gt.f32.partialorder %v564, 0.0
    %v566 = vmul.f32 %v564, 0.01
    %v567 = vsel %vm565, %v564, %v566
    %v568 = vld [vmem:[#allocation2 + $0x318] sm:$0xff]
    %v569 = vld [vmem:[#allocation2 + $0x320] sm:$0xff]
    %v570 = vld [vmem:[#allocation2 + $0x328] sm:$0xff]
    %v571 = vld [vmem:[#allocation2 + $0x330] sm:$0xff]
    %v572 = vld [vmem:[#allocation2 + $0x338] sm:$0xff]
    %v573 = vld [vmem:[#allocation2 + $0x340] sm:$0xff]
    %v574 = vld [vmem:[#allocation2 + $0x348] sm:$0xff]
    %v575 = vld [vmem:[#allocation2 + $0x350] sm:$0xff]
    %v576 = vld [vmem:[#allocation2 + $0x358] sm:$0xff]
    %v577 = vld [vmem:[#allocation2 + $0x360] sm:$0xff]
    %v578 = vld [vmem:[#allocation2 + $0x368] sm:$0xff]
    %v579 = vld [vmem:[#allocation2 + $0x370] sm:$0xff]
    %v580 = vld [vmem:[#allocation2 + $0x378] sm:$0xff]
    %v581 = vld [vmem:[#allocation2 + $0x380] sm:$0xff]
    %v582 = vld [vmem:[#allocation2 + $0x388] sm:$0xff]
    %v583 = vld [vmem:[#allocation2 + $0x390] sm:$0xff]
    %v584 = vld [vmem:[#allocation2 + $0x418] sm:$0x1]
    %v585 = vlaneseq
    %v586 = vshrl.u32 %v585, 7
    %v587 = vsub.s32 0, %v586
    %v588 = vrot.slane %v584, %v587
    %589 = vmatprep.subr.mxu0 0.0
    %590 = vmatpush1.msra.mxu0 %v568
    %591 = vmatprep.subr.mxu0 0.0
    %592 = vmatpush1.msra.mxu0 %v569
    %593 = vmatprep.subr.mxu0 0.0
    %594 = vmatpush1.msra.mxu0 %v570
    %595 = vmatprep.subr.mxu0 0.0
    %596 = vmatpush1.msra.mxu0 %v571
    %597 = vmatprep.subr.mxu0 0.0
    %598 = vmatpush1.msra.mxu0 %v572
    %599 = vmatprep.subr.mxu0 0.0
    %600 = vmatpush1.msra.mxu0 %v573
    %601 = vmatprep.subr.mxu0 0.0
    %602 = vmatpush1.msra.mxu0 %v574
    %603 = vmatprep.subr.mxu0 0.0
    %604 = vmatpush1.msra.mxu0 %v575
    %605 = vmatprep.subr.mxu0 0.0
    %606 = vmatpush1.msra.mxu0 %v576
    %607 = vmatprep.subr.mxu0 0.0
    %608 = vmatpush1.msra.mxu0 %v577
    %609 = vmatprep.subr.mxu0 0.0
    %610 = vmatpush1.msra.mxu0 %v578
    %611 = vmatprep.subr.mxu0 0.0
    %612 = vmatpush1.msra.mxu0 %v579
    %613 = vmatprep.subr.mxu0 0.0
    %614 = vmatpush1.msra.mxu0 %v580
    %615 = vmatprep.subr.mxu0 0.0
    %616 = vmatpush1.msra.mxu0 %v581
    %617 = vmatprep.subr.mxu0 0.0
    %618 = vmatpush1.msra.mxu0 %v582
    %619 = vmatprep.subr.mxu0 0.0
    %620 = vmatpush1.msra.mxu0 %v583
    %621 = vmatprep.subr.mxu0 0.0
    %622 = vmatpush1.msra.mxu0 0.0
    %623 = vmatprep.subr.mxu0 0.0
    %624 = vmatpush1.msra.mxu0 0.0
    %625 = vmatprep.subr.mxu0 0.0
    %626 = vmatpush1.msra.mxu0 0.0
    %627 = vmatprep.subr.mxu0 0.0
    %628 = vmatpush1.msra.mxu0 0.0
    %629 = vmatprep.subr.mxu0 0.0
    %630 = vmatpush1.msra.mxu0 0.0
    %631 = vmatprep.subr.mxu0 0.0
    %632 = vmatpush1.msra.mxu0 0.0
    %633 = vmatprep.subr.mxu0 0.0
    %634 = vmatpush1.msra.mxu0 0.0
    %635 = vmatprep.subr.mxu0 0.0
    %636 = vmatpush1.msra.mxu0 0.0
    %637 = vmatprep.subr.mxu0 0.0
    %638 = vmatpush1.msra.mxu0 0.0
    %639 = vmatprep.subr.mxu0 0.0
    %640 = vmatpush1.msra.mxu0 0.0
    %641 = vmatprep.subr.mxu0 0.0
    %642 = vmatpush1.msra.mxu0 0.0
    %643 = vmatprep.subr.mxu0 0.0
    %644 = vmatpush1.msra.mxu0 0.0
    %645 = vmatprep.subr.mxu0 0.0
    %646 = vmatpush1.msra.mxu0 0.0
    %647 = vmatprep.subr.mxu0 0.0
    %648 = vmatpush1.msra.mxu0 0.0
    %649 = vmatprep.subr.mxu0 0.0
    %650 = vmatpush1.msra.mxu0 0.0
    %651 = vmatprep.subr.mxu0 0.0
    %652 = vmatpush1.msra.mxu0 0.0
    %653 = vmatprep.mubr.f32.mxu0 0.0
    %654 = vmatmul.mubr.f32.gmra.mrb[0].mxu0 %v567
    %v655 = vpop.f32.mrb[0].mxu0
    %v656 = vadd.f32 %v588, %v655
    %v657 = vpop.f32.mrb[0].mxu0
    %658 = vdwg.mxu0
    %vm659 = vcmp.gt.f32.partialorder %v656, 0.0
    %v660 = vmul.f32 %v656, 0.01
    %v661 = vsel %vm659, %v656, %v660
    %v662 = vld [vmem:[#allocation2 + $0x420] sm:$0xff]
    %v663 = vld [vmem:[#allocation2 + $0x428] sm:$0xff]
    %v664 = vld [vmem:[#allocation2 + $0x430] sm:$0xff]
    %v665 = vld [vmem:[#allocation2 + $0x438] sm:$0xff]
    %v666 = vld [vmem:[#allocation2 + $0x440] sm:$0xff]
    %v667 = vld [vmem:[#allocation2 + $0x448] sm:$0xff]
    %v668 = vld [vmem:[#allocation2 + $0x450] sm:$0xff]
    %v669 = vld [vmem:[#allocation2 + $0x458] sm:$0xff]
    %v670 = vld [vmem:[#allocation2 + $0x460] sm:$0xff]
    %v671 = vld [vmem:[#allocation2 + $0x468] sm:$0xff]
    %v672 = vld [vmem:[#allocation2 + $0x470] sm:$0xff]
    %v673 = vld [vmem:[#allocation2 + $0x478] sm:$0xff]
    %v674 = vld [vmem:[#allocation2 + $0x480] sm:$0xff]
    %v675 = vld [vmem:[#allocation2 + $0x488] sm:$0xff]
    %v676 = vld [vmem:[#allocation2 + $0x490] sm:$0xff]
    %v677 = vld [vmem:[#allocation2 + $0x498] sm:$0xff]
    %v678 = vld [vmem:[#allocation2 + $0x520] sm:$0x1]
    %v679 = vlaneseq
    %v680 = vshrl.u32 %v679, 7
    %v681 = vsub.s32 0, %v680
    %v682 = vrot.slane %v678, %v681
    %683 = vmatprep.subr.mxu0 0.0
    %684 = vmatpush1.msra.mxu0 %v662
    %685 = vmatprep.subr.mxu0 0.0
    %686 = vmatpush1.msra.mxu0 %v663
    %687 = vmatprep.subr.mxu0 0.0
    %688 = vmatpush1.msra.mxu0 %v664
    %689 = vmatprep.subr.mxu0 0.0
    %690 = vmatpush1.msra.mxu0 %v665
    %691 = vmatprep.subr.mxu0 0.0
    %692 = vmatpush1.msra.mxu0 %v666
    %693 = vmatprep.subr.mxu0 0.0
    %694 = vmatpush1.msra.mxu0 %v667
    %695 = vmatprep.subr.mxu0 0.0
    %696 = vmatpush1.msra.mxu0 %v668
    %697 = vmatprep.subr.mxu0 0.0
    %698 = vmatpush1.msra.mxu0 %v669
    %699 = vmatprep.subr.mxu0 0.0
    %700 = vmatpush1.msra.mxu0 %v670
    %701 = vmatprep.subr.mxu0 0.0
    %702 = vmatpush1.msra.mxu0 %v671
    %703 = vmatprep.subr.mxu0 0.0
    %704 = vmatpush1.msra.mxu0 %v672
    %705 = vmatprep.subr.mxu0 0.0
    %706 = vmatpush1.msra.mxu0 %v673
    %707 = vmatprep.subr.mxu0 0.0
    %708 = vmatpush1.msra.mxu0 %v674
    %709 = vmatprep.subr.mxu0 0.0
    %710 = vmatpush1.msra.mxu0 %v675
    %711 = vmatprep.subr.mxu0 0.0
    %712 = vmatpush1.msra.mxu0 %v676
    %713 = vmatprep.subr.mxu0 0.0
    %714 = vmatpush1.msra.mxu0 %v677
    %715 = vmatprep.subr.mxu0 0.0
    %716 = vmatpush1.msra.mxu0 0.0
    %717 = vmatprep.subr.mxu0 0.0
    %718 = vmatpush1.msra.mxu0 0.0
    %719 = vmatprep.subr.mxu0 0.0
    %720 = vmatpush1.msra.mxu0 0.0
    %721 = vmatprep.subr.mxu0 0.0
    %722 = vmatpush1.msra.mxu0 0.0
    %723 = vmatprep.subr.mxu0 0.0
    %724 = vmatpush1.msra.mxu0 0.0
    %725 = vmatprep.subr.mxu0 0.0
    %726 = vmatpush1.msra.mxu0 0.0
    %727 = vmatprep.subr.mxu0 0.0
    %728 = vmatpush1.msra.mxu0 0.0
    %729 = vmatprep.subr.mxu0 0.0
    %730 = vmatpush1.msra.mxu0 0.0
    %731 = vmatprep.subr.mxu0 0.0
    %732 = vmatpush1.msra.mxu0 0.0
    %733 = vmatprep.subr.mxu0 0.0
    %734 = vmatpush1.msra.mxu0 0.0
    %735 = vmatprep.subr.mxu0 0.0
    %736 = vmatpush1.msra.mxu0 0.0
    %737 = vmatprep.subr.mxu0 0.0
    %738 = vmatpush1.msra.mxu0 0.0
    %739 = vmatprep.subr.mxu0 0.0
    %740 = vmatpush1.msra.mxu0 0.0
    %741 = vmatprep.subr.mxu0 0.0
    %742 = vmatpush1.msra.mxu0 0.0
    %743 = vmatprep.subr.mxu0 0.0
    %744 = vmatpush1.msra.mxu0 0.0
    %745 = vmatprep.subr.mxu0 0.0
    %746 = vmatpush1.msra.mxu0 0.0
    %747 = vmatprep.mubr.f32.mxu0 0.0
    %748 = vmatmul.mubr.f32.gmra.mrb[0].mxu0 %v661
    %v749 = vpop.f32.mrb[0].mxu0
    %v750 = vadd.f32 %v682, %v749
    %v751 = vpop.f32.mrb[0].mxu0
    %752 = vdwg.mxu0
    %vm753 = vcmp.gt.f32.partialorder %v750, 0.0
    %v754 = vmul.f32 %v750, 0.01
    %v755 = vsel %vm753, %v750, %v754
    %v756 = vld [vmem:[#allocation2 + $0x528] sm:$0x1]
    %v757 = vld [vmem:[#allocation2 + $0x530] sm:$0x1]
    %v758 = vlaneseq
    %v759 = vshrl.u32 %v758, 7
    %v760 = vsub.s32 0, %v759
    %v761 = vrot.slane %v756, %v760
    %v762 = vmul.f32 %v755, %v761
    %763 = vadd.xlane.f32.xlu0 %v762
    %v764 = vpop.xlane.xlu0 %763
    %v765 = vlaneseq
    %v766 = vshrl.u32 %v765, 7
    %v767 = vsub.s32 0, %v766
    %v768 = vrot.slane %v757, %v767
    %v769 = vadd.f32 %v764, %v768
    %vm770 = vcmp.gt.f32.partialorder %v769, 0.0
    %v771 = vsel %vm770, 1.0, 0.01
    %773 = vset.pattern.permute.xlu0 0
    %774 = vperm.xlu0 %773, %v771
    %v775 = vpop.permute.xlu0 %774
    %v777 = vmul.f32 %v775, %v761
    %v778 = vsel %vm753, 1.0, 0.01
    %v779 = vmul.f32 %v777, %v778
    %v780 = vld [vmem:[#allocation2 + $0x4a0] sm:$0xff]
    %v781 = vld [vmem:[#allocation2 + $0x4a8] sm:$0xff]
    %v782 = vld [vmem:[#allocation2 + $0x4b0] sm:$0xff]
    %v783 = vld [vmem:[#allocation2 + $0x4b8] sm:$0xff]
    %v784 = vld [vmem:[#allocation2 + $0x4c0] sm:$0xff]
    %v785 = vld [vmem:[#allocation2 + $0x4c8] sm:$0xff]
    %v786 = vld [vmem:[#allocation2 + $0x4d0] sm:$0xff]
    %v787 = vld [vmem:[#allocation2 + $0x4d8] sm:$0xff]
    %v788 = vld [vmem:[#allocation2 + $0x4e0] sm:$0xff]
    %v789 = vld [vmem:[#allocation2 + $0x4e8] sm:$0xff]
    %v790 = vld [vmem:[#allocation2 + $0x4f0] sm:$0xff]
    %v791 = vld [vmem:[#allocation2 + $0x4f8] sm:$0xff]
    %v792 = vld [vmem:[#allocation2 + $0x500] sm:$0xff]
    %v793 = vld [vmem:[#allocation2 + $0x508] sm:$0xff]
    %v794 = vld [vmem:[#allocation2 + $0x510] sm:$0xff]
    %v795 = vld [vmem:[#allocation2 + $0x518] sm:$0xff]
    %796 = vmatprep.subr.mxu0 0.0
    %797 = vmatpush1.msra.mxu0 %v780
    %798 = vmatprep.subr.mxu0 0.0
    %799 = vmatpush1.msra.mxu0 %v781
    %800 = vmatprep.subr.mxu0 0.0
    %801 = vmatpush1.msra.mxu0 %v782
    %802 = vmatprep.subr.mxu0 0.0
    %803 = vmatpush1.msra.mxu0 %v783
    %804 = vmatprep.subr.mxu0 0.0
    %805 = vmatpush1.msra.mxu0 %v784
    %806 = vmatprep.subr.mxu0 0.0
    %807 = vmatpush1.msra.mxu0 %v785
    %808 = vmatprep.subr.mxu0 0.0
    %809 = vmatpush1.msra.mxu0 %v786
    %810 = vmatprep.subr.mxu0 0.0
    %811 = vmatpush1.msra.mxu0 %v787
    %812 = vmatprep.subr.mxu0 0.0
    %813 = vmatpush1.msra.mxu0 %v788
    %814 = vmatprep.subr.mxu0 0.0
    %815 = vmatpush1.msra.mxu0 %v789
    %816 = vmatprep.subr.mxu0 0.0
    %817 = vmatpush1.msra.mxu0 %v790
    %818 = vmatprep.subr.mxu0 0.0
    %819 = vmatpush1.msra.mxu0 %v791
    %820 = vmatprep.subr.mxu0 0.0
    %821 = vmatpush1.msra.mxu0 %v792
    %822 = vmatprep.subr.mxu0 0.0
    %823 = vmatpush1.msra.mxu0 %v793
    %824 = vmatprep.subr.mxu0 0.0
    %825 = vmatpush1.msra.mxu0 %v794
    %826 = vmatprep.subr.mxu0 0.0
    %827 = vmatpush1.msra.mxu0 %v795
    %828 = vmatprep.subr.mxu0 0.0
    %829 = vmatpush1.msra.mxu0 0.0
    %830 = vmatprep.subr.mxu0 0.0
    %831 = vmatpush1.msra.mxu0 0.0
    %832 = vmatprep.subr.mxu0 0.0
    %833 = vmatpush1.msra.mxu0 0.0
    %834 = vmatprep.subr.mxu0 0.0
    %835 = vmatpush1.msra.mxu0 0.0
    %836 = vmatprep.subr.mxu0 0.0
    %837 = vmatpush1.msra.mxu0 0.0
    %838 = vmatprep.subr.mxu0 0.0
    %839 = vmatpush1.msra.mxu0 0.0
    %840 = vmatprep.subr.mxu0 0.0
    %841 = vmatpush1.msra.mxu0 0.0
    %842 = vmatprep.subr.mxu0 0.0
    %843 = vmatpush1.msra.mxu0 0.0
    %844 = vmatprep.subr.mxu0 0.0
    %845 = vmatpush1.msra.mxu0 0.0
    %846 = vmatprep.subr.mxu0 0.0
    %847 = vmatpush1.msra.mxu0 0.0
    %848 = vmatprep.subr.mxu0 0.0
    %849 = vmatpush1.msra.mxu0 0.0
    %850 = vmatprep.subr.mxu0 0.0
    %851 = vmatpush1.msra.mxu0 0.0
    %852 = vmatprep.subr.mxu0 0.0
    %853 = vmatpush1.msra.mxu0 0.0
    %854 = vmatprep.subr.mxu0 0.0
    %855 = vmatpush1.msra.mxu0 0.0
    %856 = vmatprep.subr.mxu0 0.0
    %857 = vmatpush1.msra.mxu0 0.0
    %858 = vmatprep.subr.mxu0 0.0
    %859 = vmatpush1.msra.mxu0 0.0
    %860 = vmatprep.mubr.f32.mxu0 0.0
    %861 = vmatmul.mubr.f32.gmra.mrb[0].mxu0 %v779
    %v862 = vpop.f32.mrb[0].mxu0
    %v863 = vadd.f32 0.0, %v862
    %v864 = vpop.f32.mrb[0].mxu0
    %865 = vdwg.mxu0
    %v866 = vsel %vm659, 1.0, 0.01
    %v867 = vmul.f32 %v863, %v866
    %v868 = vld [vmem:[#allocation2 + $0x398] sm:$0xff]
    %v869 = vld [vmem:[#allocation2 + $0x3a0] sm:$0xff]
    %v870 = vld [vmem:[#allocation2 + $0x3a8] sm:$0xff]
    %v871 = vld [vmem:[#allocation2 + $0x3b0] sm:$0xff]
    %v872 = vld [vmem:[#allocation2 + $0x3b8] sm:$0xff]
    %v873 = vld [vmem:[#allocation2 + $0x3c0] sm:$0xff]
    %v874 = vld [vmem:[#allocation2 + $0x3c8] sm:$0xff]
    %v875 = vld [vmem:[#allocation2 + $0x3d0] sm:$0xff]
    %v876 = vld [vmem:[#allocation2 + $0x3d8] sm:$0xff]
    %v877 = vld [vmem:[#allocation2 + $0x3e0] sm:$0xff]
    %v878 = vld [vmem:[#allocation2 + $0x3e8] sm:$0xff]
    %v879 = vld [vmem:[#allocation2 + $0x3f0] sm:$0xff]
    %v880 = vld [vmem:[#allocation2 + $0x3f8] sm:$0xff]
    %v881 = vld [vmem:[#allocation2 + $0x400] sm:$0xff]
    %v882 = vld [vmem:[#allocation2 + $0x408] sm:$0xff]
    %v883 = vld [vmem:[#allocation2 + $0x410] sm:$0xff]
    %884 = vmatprep.subr.mxu0 0.0
    %885 = vmatpush1.msra.mxu0 %v868
    %886 = vmatprep.subr.mxu0 0.0
    %887 = vmatpush1.msra.mxu0 %v869
    %888 = vmatprep.subr.mxu0 0.0
    %889 = vmatpush1.msra.mxu0 %v870
    %890 = vmatprep.subr.mxu0 0.0
    %891 = vmatpush1.msra.mxu0 %v871
    %892 = vmatprep.subr.mxu0 0.0
    %893 = vmatpush1.msra.mxu0 %v872
    %894 = vmatprep.subr.mxu0 0.0
    %895 = vmatpush1.msra.mxu0 %v873
    %896 = vmatprep.subr.mxu0 0.0
    %897 = vmatpush1.msra.mxu0 %v874
    %898 = vmatprep.subr.mxu0 0.0
    %899 = vmatpush1.msra.mxu0 %v875
    %900 = vmatprep.subr.mxu0 0.0
    %901 = vmatpush1.msra.mxu0 %v876
    %902 = vmatprep.subr.mxu0 0.0
    %903 = vmatpush1.msra.mxu0 %v877
    %904 = vmatprep.subr.mxu0 0.0
    %905 = vmatpush1.msra.mxu0 %v878
    %906 = vmatprep.subr.mxu0 0.0
    %907 = vmatpush1.msra.mxu0 %v879
    %908 = vmatprep.subr.mxu0 0.0
    %909 = vmatpush1.msra.mxu0 %v880
    %910 = vmatprep.subr.mxu0 0.0
    %911 = vmatpush1.msra.mxu0 %v881
    %912 = vmatprep.subr.mxu0 0.0
    %913 = vmatpush1.msra.mxu0 %v882
    %914 = vmatprep.subr.mxu0 0.0
    %915 = vmatpush1.msra.mxu0 %v883
    %916 = vmatprep.subr.mxu0 0.0
    %917 = vmatpush1.msra.mxu0 0.0
    %918 = vmatprep.subr.mxu0 0.0
    %919 = vmatpush1.msra.mxu0 0.0
    %920 = vmatprep.subr.mxu0 0.0
    %921 = vmatpush1.msra.mxu0 0.0
    %922 = vmatprep.subr.mxu0 0.0
    %923 = vmatpush1.msra.mxu0 0.0
    %924 = vmatprep.subr.mxu0 0.0
    %925 = vmatpush1.msra.mxu0 0.0
    %926 = vmatprep.subr.mxu0 0.0
    %927 = vmatpush1.msra.mxu0 0.0
    %928 = vmatprep.subr.mxu0 0.0
    %929 = vmatpush1.msra.mxu0 0.0
    %930 = vmatprep.subr.mxu0 0.0
    %931 = vmatpush1.msra.mxu0 0.0
    %932 = vmatprep.subr.mxu0 0.0
    %933 = vmatpush1.msra.mxu0 0.0
    %934 = vmatprep.subr.mxu0 0.0
    %935 = vmatpush1.msra.mxu0 0.0
    %936 = vmatprep.subr.mxu0 0.0
    %937 = vmatpush1.msra.mxu0 0.0
    %938 = vmatprep.subr.mxu0 0.0
    %939 = vmatpush1.msra.mxu0 0.0
    %940 = vmatprep.subr.mxu0 0.0
    %941 = vmatpush1.msra.mxu0 0.0
    %942 = vmatprep.subr.mxu0 0.0
    %943 = vmatpush1.msra.mxu0 0.0
    %944 = vmatprep.subr.mxu0 0.0
    %945 = vmatpush1.msra.mxu0 0.0
    %946 = vmatprep.subr.mxu0 0.0
    %947 = vmatpush1.msra.mxu0 0.0
    %948 = vmatprep.mubr.f32.mxu0 0.0
    %949 = vmatmul.mubr.f32.gmra.mrb[0].mxu0 %v867
    %v950 = vpop.f32.mrb[0].mxu0
    %v951 = vadd.f32 0.0, %v950
    %v952 = vpop.f32.mrb[0].mxu0
    %953 = vdwg.mxu0
    %v954 = vsel %vm565, 1.0, 0.01
    %v955 = vmul.f32 %v951, %v954
    %v956 = vld [vmem:[#allocation2 + $0x190] sm:$0xff]
    %v957 = vld [vmem:[#allocation2 + $0x198] sm:$0xff]
    %v958 = vld [vmem:[#allocation2 + $0x1a0] sm:$0xff]
    %v959 = vld [vmem:[#allocation2 + $0x1a8] sm:$0xff]
    %v960 = vld [vmem:[#allocation2 + $0x1b0] sm:$0xff]
    %v961 = vld [vmem:[#allocation2 + $0x1b8] sm:$0xff]
    %v962 = vld [vmem:[#allocation2 + $0x1c0] sm:$0xff]
    %v963 = vld [vmem:[#allocation2 + $0x1c8] sm:$0xff]
    %v964 = vld [vmem:[#allocation2 + $0x1d0] sm:$0xff]
    %v965 = vld [vmem:[#allocation2 + $0x1d8] sm:$0xff]
    %v966 = vld [vmem:[#allocation2 + $0x1e0] sm:$0xff]
    %v967 = vld [vmem:[#allocation2 + $0x1e8] sm:$0xff]
    %v968 = vld [vmem:[#allocation2 + $0x1f0] sm:$0xff]
    %v969 = vld [vmem:[#allocation2 + $0x1f8] sm:$0xff]
    %v970 = vld [vmem:[#allocation2 + $0x200] sm:$0xff]
    %v971 = vld [vmem:[#allocation2 + $0x208] sm:$0xff]
    %v972 = vld [vmem:[#allocation2 + $0x210] sm:$0xff]
    %v973 = vld [vmem:[#allocation2 + $0x218] sm:$0xff]
    %v974 = vld [vmem:[#allocation2 + $0x220] sm:$0xff]
    %v975 = vld [vmem:[#allocation2 + $0x228] sm:$0xff]
    %v976 = vld [vmem:[#allocation2 + $0x230] sm:$0xff]
    %v977 = vld [vmem:[#allocation2 + $0x238] sm:$0xff]
    %v978 = vld [vmem:[#allocation2 + $0x240] sm:$0xff]
    %v979 = vld [vmem:[#allocation2 + $0x248] sm:$0xff]
    %v980 = vld [vmem:[#allocation2 + $0x250] sm:$0xff]
    %v981 = vld [vmem:[#allocation2 + $0x258] sm:$0xff]
    %v982 = vld [vmem:[#allocation2 + $0x260] sm:$0xff]
    %v983 = vld [vmem:[#allocation2 + $0x268] sm:$0xff]
    %v984 = vld [vmem:[#allocation2 + $0x270] sm:$0xff]
    %v985 = vld [vmem:[#allocation2 + $0x278] sm:$0xff]
    %v986 = vld [vmem:[#allocation2 + $0x280] sm:$0xff]
    %v987 = vld [vmem:[#allocation2 + $0x288] sm:$0xff]
    %v988 = vld [vmem:[#allocation2 + $0x290] sm:$0xff]
    %v989 = vld [vmem:[#allocation2 + $0x298] sm:$0xff]
    %v990 = vld [vmem:[#allocation2 + $0x2a0] sm:$0xff]
    %v991 = vld [vmem:[#allocation2 + $0x2a8] sm:$0xff]
    %v992 = vld [vmem:[#allocation2 + $0x2b0] sm:$0xff]
    %v993 = vld [vmem:[#allocation2 + $0x2b8] sm:$0xff]
    %v994 = vld [vmem:[#allocation2 + $0x2c0] sm:$0xff]
    %v995 = vld [vmem:[#allocation2 + $0x2c8] sm:$0xff]
    %v996 = vld [vmem:[#allocation2 + $0x2d0] sm:$0xff]
    %v997 = vld [vmem:[#allocation2 + $0x2d8] sm:$0xff]
    %v998 = vld [vmem:[#allocation2 + $0x2e0] sm:$0xff]
    %v999 = vld [vmem:[#allocation2 + $0x2e8] sm:$0xff]
    %v1000 = vld [vmem:[#allocation2 + $0x2f0] sm:$0xff]
    %v1001 = vld [vmem:[#allocation2 + $0x2f8] sm:$0xff]
    %v1002 = vld [vmem:[#allocation2 + $0x300] sm:$0xff]
    %v1003 = vld [vmem:[#allocation2 + $0x308] sm:$0xff]
    %1004 = vmatprep.subr.mxu0 0.0
    %1005 = vmatpush1.msra.mxu0 %v972
    %1006 = vmatprep.subr.mxu0 0.0
    %1007 = vmatpush1.msra.mxu0 %v973
    %1008 = vmatprep.subr.mxu0 0.0
    %1009 = vmatpush1.msra.mxu0 %v974
    %1010 = vmatprep.subr.mxu0 0.0
    %1011 = vmatpush1.msra.mxu0 %v975
    %1012 = vmatprep.subr.mxu0 0.0
    %1013 = vmatpush1.msra.mxu0 %v976
    %1014 = vmatprep.subr.mxu0 0.0
    %1015 = vmatpush1.msra.mxu0 %v977
    %1016 = vmatprep.subr.mxu0 0.0
    %1017 = vmatpush1.msra.mxu0 %v978
    %1018 = vmatprep.subr.mxu0 0.0
    %1019 = vmatpush1.msra.mxu0 %v979
    %1020 = vmatprep.subr.mxu0 0.0
    %1021 = vmatpush1.msra.mxu0 %v980
    %1022 = vmatprep.subr.mxu0 0.0
    %1023 = vmatpush1.msra.mxu0 %v981
    %1024 = vmatprep.subr.mxu0 0.0
    %1025 = vmatpush1.msra.mxu0 %v982
    %1026 = vmatprep.subr.mxu0 0.0
    %1027 = vmatpush1.msra.mxu0 %v983
    %1028 = vmatprep.subr.mxu0 0.0
    %1029 = vmatpush1.msra.mxu0 %v984
    %1030 = vmatprep.subr.mxu0 0.0
    %1031 = vmatpush1.msra.mxu0 %v985
    %1032 = vmatprep.subr.mxu0 0.0
    %1033 = vmatpush1.msra.mxu0 %v986
    %1034 = vmatprep.subr.mxu0 0.0
    %1035 = vmatpush1.msra.mxu0 %v987
    %1036 = vmatprep.subr.mxu0 0.0
    %1037 = vmatpush1.msra.mxu0 0.0
    %1038 = vmatprep.subr.mxu0 0.0
    %1039 = vmatpush1.msra.mxu0 0.0
    %1040 = vmatprep.subr.mxu0 0.0
    %1041 = vmatpush1.msra.mxu0 0.0
    %1042 = vmatprep.subr.mxu0 0.0
    %1043 = vmatpush1.msra.mxu0 0.0
    %1044 = vmatprep.subr.mxu0 0.0
    %1045 = vmatpush1.msra.mxu0 0.0
    %1046 = vmatprep.subr.mxu0 0.0
    %1047 = vmatpush1.msra.mxu0 0.0
    %1048 = vmatprep.subr.mxu0 0.0
    %1049 = vmatpush1.msra.mxu0 0.0
    %1050 = vmatprep.subr.mxu0 0.0
    %1051 = vmatpush1.msra.mxu0 0.0
    %1052 = vmatprep.subr.mxu0 0.0
    %1053 = vmatpush1.msra.mxu0 0.0
    %1054 = vmatprep.subr.mxu0 0.0
    %1055 = vmatpush1.msra.mxu0 0.0
    %1056 = vmatprep.subr.mxu0 0.0
    %1057 = vmatpush1.msra.mxu0 0.0
    %1058 = vmatprep.subr.mxu0 0.0
    %1059 = vmatpush1.msra.mxu0 0.0
    %1060 = vmatprep.subr.mxu0 0.0
    %1061 = vmatpush1.msra.mxu0 0.0
    %1062 = vmatprep.subr.mxu0 0.0
    %1063 = vmatpush1.msra.mxu0 0.0
    %1064 = vmatprep.subr.mxu0 0.0
    %1065 = vmatpush1.msra.mxu0 0.0
    %1066 = vmatprep.subr.mxu0 0.0
    %1067 = vmatpush1.msra.mxu0 0.0
    %1068 = vmatprep.mubr.f32.mxu0 0.0
    %1069 = vmatmul.mubr.f32.gmra.mrb[0].mxu0 %v955
    %v1070 = vpop.f32.mrb[0].mxu0
    %v1071 = vadd.f32 0.0, %v1070
    %v1072 = vpop.f32.mrb[0].mxu0
    %1073 = vdwg.mxu0
    %1074 = vmatprep.subr.mxu0 0.0
    %1075 = vmatpush1.msra.mxu0 %v988
    %1076 = vmatprep.subr.mxu0 0.0
    %1077 = vmatpush1.msra.mxu0 %v989
    %1078 = vmatprep.subr.mxu0 0.0
    %1079 = vmatpush1.msra.mxu0 %v990
    %1080 = vmatprep.subr.mxu0 0.0
    %1081 = vmatpush1.msra.mxu0 %v991
    %1082 = vmatprep.subr.mxu0 0.0
    %1083 = vmatpush1.msra.mxu0 %v992
    %1084 = vmatprep.subr.mxu0 0.0
    %1085 = vmatpush1.msra.mxu0 %v993
    %1086 = vmatprep.subr.mxu0 0.0
    %1087 = vmatpush1.msra.mxu0 %v994
    %1088 = vmatprep.subr.mxu0 0.0
    %1089 = vmatpush1.msra.mxu0 %v995
    %1090 = vmatprep.subr.mxu0 0.0
    %1091 = vmatpush1.msra.mxu0 %v996
    %1092 = vmatprep.subr.mxu0 0.0
    %1093 = vmatpush1.msra.mxu0 %v997
    %1094 = vmatprep.subr.mxu0 0.0
    %1095 = vmatpush1.msra.mxu0 %v998
    %1096 = vmatprep.subr.mxu0 0.0
    %1097 = vmatpush1.msra.mxu0 %v999
    %1098 = vmatprep.subr.mxu0 0.0
    %1099 = vmatpush1.msra.mxu0 %v1000
    %1100 = vmatprep.subr.mxu0 0.0
    %1101 = vmatpush1.msra.mxu0 %v1001
    %1102 = vmatprep.subr.mxu0 0.0
    %1103 = vmatpush1.msra.mxu0 %v1002
    %1104 = vmatprep.subr.mxu0 0.0
    %1105 = vmatpush1.msra.mxu0 %v1003
    %1106 = vmatprep.subr.mxu0 0.0
    %1107 = vmatpush1.msra.mxu0 0.0
    %1108 = vmatprep.subr.mxu0 0.0
    %1109 = vmatpush1.msra.mxu0 0.0
    %1110 = vmatprep.subr.mxu0 0.0
    %1111 = vmatpush1.msra.mxu0 0.0
    %1112 = vmatprep.subr.mxu0 0.0
    %1113 = vmatpush1.msra.mxu0 0.0
    %1114 = vmatprep.subr.mxu0 0.0
    %1115 = vmatpush1.msra.mxu0 0.0
    %1116 = vmatprep.subr.mxu0 0.0
    %1117 = vmatpush1.msra.mxu0 0.0
    %1118 = vmatprep.subr.mxu0 0.0
    %1119 = vmatpush1.msra.mxu0 0.0
    %1120 = vmatprep.subr.mxu0 0.0
    %1121 = vmatpush1.msra.mxu0 0.0
    %1122 = vmatprep.subr.mxu0 0.0
    %1123 = vmatpush1.msra.mxu0 0.0
    %1124 = vmatprep.subr.mxu0 0.0
    %1125 = vmatpush1.msra.mxu0 0.0
    %1126 = vmatprep.subr.mxu0 0.0
    %1127 = vmatpush1.msra.mxu0 0.0
    %1128 = vmatprep.subr.mxu0 0.0
    %1129 = vmatpush1.msra.mxu0 0.0
    %1130 = vmatprep.subr.mxu0 0.0
    %1131 = vmatpush1.msra.mxu0 0.0
    %1132 = vmatprep.subr.mxu0 0.0
    %1133 = vmatpush1.msra.mxu0 0.0
    %1134 = vmatprep.subr.mxu0 0.0
    %1135 = vmatpush1.msra.mxu0 0.0
    %1136 = vmatprep.subr.mxu0 0.0
    %1137 = vmatpush1.msra.mxu0 0.0
    %1138 = vmatprep.mubr.f32.mxu0 0.0
    %1139 = vmatmul.mubr.f32.gmra.mrb[0].mxu0 %v955
    %v1140 = vpop.f32.mrb[0].mxu0
    %v1141 = vadd.f32 0.0, %v1140
    %v1142 = vpop.f32.mrb[0].mxu0
    %1143 = vdwg.mxu0
    %v1144 = vmul.f32 %v1071, %v312
    %v1145 = vmul.f32 %v1141, %v209
    %v1146 = vsub.f32 %v1144, %v1145
    %v1147 = vld [vmem:[#allocation2 + $0x8] sm:$0xff]
    %v1148 = vld [vmem:[#allocation2 + $0x10] sm:$0xff]
    %v1149 = vld [vmem:[#allocation2 + $0x18] sm:$0xff]
    %v1150 = vld [vmem:[#allocation2 + $0x20] sm:$0xff]
    %v1151 = vld [vmem:[#allocation2 + $0x28] sm:$0xff]
    %v1152 = vld [vmem:[#allocation2 + $0x30] sm:$0xff]
    %v1153 = vld [vmem:[#allocation2 + $0x38] sm:$0xff]
    %v1154 = vld [vmem:[#allocation2 + $0x40] sm:$0xff]
    %v1155 = vld [vmem:[#allocation2 + $0x48] sm:$0xff]
    %v1156 = vld [vmem:[#allocation2 + $0x50] sm:$0xff]
    %v1157 = vld [vmem:[#allocation2 + $0x58] sm:$0xff]
    %v1158 = vld [vmem:[#allocation2 + $0x60] sm:$0xff]
    %v1159 = vld [vmem:[#allocation2 + $0x68] sm:$0xff]
    %v1160 = vld [vmem:[#allocation2 + $0x70] sm:$0xff]
    %v1161 = vld [vmem:[#allocation2 + $0x78] sm:$0xff]
    %v1162 = vld [vmem:[#allocation2 + $0x80] sm:$0xff]
    %1163 = vmatprep.subr.mxu0 0.0
    %1164 = vmatpush1.msra.mxu0 %v1147
    %1165 = vmatprep.subr.mxu0 0.0
    %1166 = vmatpush1.msra.mxu0 %v1148
    %1167 = vmatprep.subr.mxu0 0.0
    %1168 = vmatpush1.msra.mxu0 %v1149
    %1169 = vmatprep.subr.mxu0 0.0
    %1170 = vmatpush1.msra.mxu0 %v1150
    %1171 = vmatprep.subr.mxu0 0.0
    %1172 = vmatpush1.msra.mxu0 %v1151
    %1173 = vmatprep.subr.mxu0 0.0
    %1174 = vmatpush1.msra.mxu0 %v1152
    %1175 = vmatprep.subr.mxu0 0.0
    %1176 = vmatpush1.msra.mxu0 %v1153
    %1177 = vmatprep.subr.mxu0 0.0
    %1178 = vmatpush1.msra.mxu0 %v1154
    %1179 = vmatprep.subr.mxu0 0.0
    %1180 = vmatpush1.msra.mxu0 %v1155
    %1181 = vmatprep.subr.mxu0 0.0
    %1182 = vmatpush1.msra.mxu0 %v1156
    %1183 = vmatprep.subr.mxu0 0.0
    %1184 = vmatpush1.msra.mxu0 %v1157
    %1185 = vmatprep.subr.mxu0 0.0
    %1186 = vmatpush1.msra.mxu0 %v1158
    %1187 = vmatprep.subr.mxu0 0.0
    %1188 = vmatpush1.msra.mxu0 %v1159
    %1189 = vmatprep.subr.mxu0 0.0
    %1190 = vmatpush1.msra.mxu0 %v1160
    %1191 = vmatprep.subr.mxu0 0.0
    %1192 = vmatpush1.msra.mxu0 %v1161
    %1193 = vmatprep.subr.mxu0 0.0
    %1194 = vmatpush1.msra.mxu0 %v1162
    %1195 = vmatprep.subr.mxu0 0.0
    %1196 = vmatpush1.msra.mxu0 0.0
    %1197 = vmatprep.subr.mxu0 0.0
    %1198 = vmatpush1.msra.mxu0 0.0
    %1199 = vmatprep.subr.mxu0 0.0
    %1200 = vmatpush1.msra.mxu0 0.0
    %1201 = vmatprep.subr.mxu0 0.0
    %1202 = vmatpush1.msra.mxu0 0.0
    %1203 = vmatprep.subr.mxu0 0.0
    %1204 = vmatpush1.msra.mxu0 0.0
    %1205 = vmatprep.subr.mxu0 0.0
    %1206 = vmatpush1.msra.mxu0 0.0
    %1207 = vmatprep.subr.mxu0 0.0
    %1208 = vmatpush1.msra.mxu0 0.0
    %1209 = vmatprep.subr.mxu0 0.0
    %1210 = vmatpush1.msra.mxu0 0.0
    %1211 = vmatprep.subr.mxu0 0.0
    %1212 = vmatpush1.msra.mxu0 0.0
    %1213 = vmatprep.subr.mxu0 0.0
    %1214 = vmatpush1.msra.mxu0 0.0
    %1215 = vmatprep.subr.mxu0 0.0
    %1216 = vmatpush1.msra.mxu0 0.0
    %1217 = vmatprep.subr.mxu0 0.0
    %1218 = vmatpush1.msra.mxu0 0.0
    %1219 = vmatprep.subr.mxu0 0.0
    %1220 = vmatpush1.msra.mxu0 0.0
    %1221 = vmatprep.subr.mxu0 0.0
    %1222 = vmatpush1.msra.mxu0 0.0
    %1223 = vmatprep.subr.mxu0 0.0
    %1224 = vmatpush1.msra.mxu0 0.0
    %1225 = vmatprep.subr.mxu0 0.0
    %1226 = vmatpush1.msra.mxu0 0.0
    %1227 = vmatprep.mubr.f32.mxu0 0.0
    %1228 = vmatmul.mubr.f32.gmra.mrb[0].mxu0 %v1146
    %v1229 = vpop.f32.mrb[0].mxu0
    %v1230 = vadd.f32 0.0, %v1229
    %v1231 = vpop.f32.mrb[0].mxu0
    %1232 = vdwg.mxu0
    %1233 = vmatprep.subr.mxu0 0.0
    %1234 = vmatpush1.msra.mxu0 %v956
    %1235 = vmatprep.subr.mxu0 0.0
    %1236 = vmatpush1.msra.mxu0 %v957
    %1237 = vmatprep.subr.mxu0 0.0
    %1238 = vmatpush1.msra.mxu0 %v958
    %1239 = vmatprep.subr.mxu0 0.0
    %1240 = vmatpush1.msra.mxu0 %v959
    %1241 = vmatprep.subr.mxu0 0.0
    %1242 = vmatpush1.msra.mxu0 %v960
    %1243 = vmatprep.subr.mxu0 0.0
    %1244 = vmatpush1.msra.mxu0 %v961
    %1245 = vmatprep.subr.mxu0 0.0
    %1246 = vmatpush1.msra.mxu0 %v962
    %1247 = vmatprep.subr.mxu0 0.0
    %1248 = vmatpush1.msra.mxu0 %v963
    %1249 = vmatprep.subr.mxu0 0.0
    %1250 = vmatpush1.msra.mxu0 %v964
    %1251 = vmatprep.subr.mxu0 0.0
    %1252 = vmatpush1.msra.mxu0 %v965
    %1253 = vmatprep.subr.mxu0 0.0
    %1254 = vmatpush1.msra.mxu0 %v966
    %1255 = vmatprep.subr.mxu0 0.0
    %1256 = vmatpush1.msra.mxu0 %v967
    %1257 = vmatprep.subr.mxu0 0.0
    %1258 = vmatpush1.msra.mxu0 %v968
    %1259 = vmatprep.subr.mxu0 0.0
    %1260 = vmatpush1.msra.mxu0 %v969
    %1261 = vmatprep.subr.mxu0 0.0
    %1262 = vmatpush1.msra.mxu0 %v970
    %1263 = vmatprep.subr.mxu0 0.0
    %1264 = vmatpush1.msra.mxu0 %v971
    %1265 = vmatprep.subr.mxu0 0.0
    %1266 = vmatpush1.msra.mxu0 0.0
    %1267 = vmatprep.subr.mxu0 0.0
    %1268 = vmatpush1.msra.mxu0 0.0
    %1269 = vmatprep.subr.mxu0 0.0
    %1270 = vmatpush1.msra.mxu0 0.0
    %1271 = vmatprep.subr.mxu0 0.0
    %1272 = vmatpush1.msra.mxu0 0.0
    %1273 = vmatprep.subr.mxu0 0.0
    %1274 = vmatpush1.msra.mxu0 0.0
    %1275 = vmatprep.subr.mxu0 0.0
    %1276 = vmatpush1.msra.mxu0 0.0
    %1277 = vmatprep.subr.mxu0 0.0
    %1278 = vmatpush1.msra.mxu0 0.0
    %1279 = vmatprep.subr.mxu0 0.0
    %1280 = vmatpush1.msra.mxu0 0.0
    %1281 = vmatprep.subr.mxu0 0.0
    %1282 = vmatpush1.msra.mxu0 0.0
    %1283 = vmatprep.subr.mxu0 0.0
    %1284 = vmatpush1.msra.mxu0 0.0
    %1285 = vmatprep.subr.mxu0 0.0
    %1286 = vmatpush1.msra.mxu0 0.0
    %1287 = vmatprep.subr.mxu0 0.0
    %1288 = vmatpush1.msra.mxu0 0.0
    %1289 = vmatprep.subr.mxu0 0.0
    %1290 = vmatpush1.msra.mxu0 0.0
    %1291 = vmatprep.subr.mxu0 0.0
    %1292 = vmatpush1.msra.mxu0 0.0
    %1293 = vmatprep.subr.mxu0 0.0
    %1294 = vmatpush1.msra.mxu0 0.0
    %1295 = vmatprep.subr.mxu0 0.0
    %1296 = vmatpush1.msra.mxu0 0.0
    %1297 = vmatprep.mubr.f32.mxu0 0.0
    %1298 = vmatmul.mubr.f32.gmra.mrb[0].mxu0 %v955
    %v1299 = vpop.f32.mrb[0].mxu0
    %v1300 = vadd.f32 %v1230, %v1299
    %v1301 = vpop.f32.mrb[0].mxu0
    %1302 = vdwg.mxu0
    %1303 = vst.msk [vmem:[%s2] sm:$0xff] %vm28, %v1300
    // Predicated region
    $region14: #{fn.1} parent=1 // pred_check
      _
    $region15: #{fn.1} parent=1 // pred_check_branch
      %1305 = sbr.rel (0) target = $region17
    $region16: #{fn.1} parent=1 // pred_region
      _
    $region17: #{fn.1} parent=1 // pred_fallthru
      _
    // Predicated region
    $region18: #{fn.1} parent=1 // pred_check
      _
    $region19: #{fn.1} parent=1 // pred_check_branch
      %1307 = sbr.rel (0) target = $region21
    $region20: #{fn.1} parent=1 // pred_region
      _
    $region21: #{fn.1} parent=1 // pred_fallthru
      _
    %1308 = vsyncpa [#allocation3], 1

</llo_original>
